<compile_context>
chip_gen: v5e
topology: v5e:2x2
jax: 0.10.0
libtpu: 0.0.40
codegen_flags: <defaults>
</compile_context>

<pallas_src>
import jax
import jax.numpy as jnp
from jax.experimental import pallas as pl
from jax.experimental.pallas import tpu as pltpu


def _round_up(x, m):
    return ((x + m - 1) // m) * m


def resdd_kernel(x_ref, w0_ref, wdd_ref, w2_ref, out_ref):
    H = wdd_ref.shape[0]        # 256 (static)
    TB = x_ref.shape[0]         # batch tile (static)

    w0 = w0_ref[...]            # (784, 256)  bf16, resident
    wdd = wdd_ref[...]          # (256, 512)  bf16, fused [Wd^T | Wd1^T]
    w2 = w2_ref[...]            # (256, 128)  bf16, lane-padded fc2

    # Split the batch tile into independent row sub-tiles so the scheduler can
    # overlap the MXU matmul of one sub-tile with the VPU combine of the other
    # inside the dd loop (the two chains share no data dependencies).
    n_sub = 2 if (TB >= 256 and TB % 16 == 0) else 1
    sub = TB // n_sub

    hs, cs = [], []
    for s in range(n_sub):
        # fc0: (sub, 784) @ (784, 256) -> (sub, 256), f32 accumulate.
        xs = x_ref[s * sub:(s + 1) * sub, :].astype(w0.dtype)
        h = jnp.dot(xs, w0, preferred_element_type=jnp.float32)
        hs.append(h)
        cs.append(h)            # residual gate kept in f32

    # 4 dd iterations, statically unrolled; one wide matmul per iteration:
    #   p = h @ [Wd^T | Wd1^T];  h = p[:, :H] * c + p[:, H:]
    for _ in range(4):
        ps = [jnp.dot(hs[s].astype(wdd.dtype), wdd,
                      preferred_element_type=jnp.float32)
              for s in range(n_sub)]
        hs = [ps[s][:, :H] * cs[s] + ps[s][:, H:] for s in range(n_sub)]

    # fc2 (lane-padded to 128 output columns): (sub, 256) @ (256, 128)
    for s in range(n_sub):
        out_ref[s * sub:(s + 1) * sub, :] = jnp.dot(
            hs[s].astype(w2.dtype), w2,
            preferred_element_type=jnp.float32).astype(out_ref.dtype)


def prepare_weights(w_fc0, w_dd, w_dd1, w_fc2, *, out_pad=128):
    """One-time weight prep (PyTorch (out, in) layout -> kernel layout)."""
    O = w_fc2.shape[0]
    w0_t = w_fc0.T.astype(jnp.bfloat16)                                # (784, 256)
    wdd_t = jnp.concatenate([w_dd.T, w_dd1.T], axis=1).astype(jnp.bfloat16)  # (256, 512)
    w2_t = jnp.pad(w_fc2.T, ((0, 0), (0, out_pad - O))).astype(jnp.bfloat16)  # (256, 128)
    return w0_t, wdd_t, w2_t


def resdd_forward(x, w0_t, wdd_t, w2_t, *, num_classes=10, tb=1024):
    """x: (B, 784) f32; prepped weights from prepare_weights. Returns (B, 10) f32."""
    B, K = x.shape              # (B, 784)
    H = w0_t.shape[1]           # 256
    OP = w2_t.shape[1]          # 128 (lane-padded output)

    # Choose the batch tile: never pad a small batch to a huge tile; for large
    # batches balance the tiles so the grid has >= 2 even steps (v7x megacore).
    b_aligned = _round_up(B, 8)
    if b_aligned <= tb:
        tb_eff = b_aligned
    else:
        n_guess = pl.cdiv(b_aligned, tb)
        tb_eff = _round_up(pl.cdiv(b_aligned, n_guess), 8)
    n_tiles = pl.cdiv(b_aligned, tb_eff)
    Bp = n_tiles * tb_eff

    x_p = x if Bp == B else jnp.pad(x, ((0, Bp - B), (0, 0)))

    flops = 2 * Bp * (K * H + 4 * H * 2 * H + H * OP)
    bytes_accessed = (Bp * K * 4 + Bp * OP * 4
                      + w0_t.size * 2 + wdd_t.size * 2 + w2_t.size * 2)

    out = pl.pallas_call(
        resdd_kernel,
        out_shape=jax.ShapeDtypeStruct((Bp, OP), jnp.float32),
        grid_spec=pltpu.PrefetchScalarGridSpec(
            num_scalar_prefetch=0,
            grid=(n_tiles,),
            in_specs=[
                pl.BlockSpec((tb_eff, K), lambda i: (i, 0)),   # x tile, f32, unpadded K
                pl.BlockSpec((K, H), lambda i: (0, 0)),        # W0^T        (resident)
                pl.BlockSpec((H, 2 * H), lambda i: (0, 0)),    # [Wd^T|Wd1^T] (resident)
                pl.BlockSpec((H, OP), lambda i: (0, 0)),       # W2^T padded  (resident)
            ],
            out_specs=pl.BlockSpec((tb_eff, OP), lambda i: (i, 0)),
        ),
        compiler_params=pltpu.CompilerParams(
            dimension_semantics=("parallel",),
            vmem_limit_bytes=48 * 1024 * 1024),
        cost_estimate=pl.CostEstimate(
            flops=flops, transcendentals=0, bytes_accessed=bytes_accessed),
    )(x_p, w0_t, wdd_t, w2_t)

    return out[:B, :num_classes]


def init_params(key):
    """Deterministic synthetic weights, PyTorch (out, in) layout."""
    k0, k1, k2, k3 = jax.random.split(key, 4)

    def lin(k, out_f, in_f):
        bound = 1.0 / jnp.sqrt(in_f)
        return jax.random.uniform(k, (out_f, in_f), jnp.float32, -bound, bound)

    w_fc0 = lin(k0, 256, 28 * 28)
    w_dd = lin(k1, 256, 256)
    w_dd1 = lin(k2, 256, 256)
    w_fc2 = lin(k3, 10, 256)
    return w_fc0, w_dd, w_dd1, w_fc2


def reference_forward(x, w_fc0, w_dd, w_dd1, w_fc2):
    """Pure-JAX f32 reference mirroring the PyTorch forward exactly."""
    h = x @ w_fc0.T
    c = h
    for _ in range(4):
        h = (h @ w_dd.T) * c + (h @ w_dd1.T)
    return h @ w_fc2.T


if __name__ == "__main__":
    key = jax.random.PRNGKey(0)
    kx, kw, kx2 = jax.random.split(key, 3)

    w_fc0, w_dd, w_dd1, w_fc2 = init_params(kw)
    w0_t, wdd_t, w2_t = prepare_weights(w_fc0, w_dd, w_dd1, w_fc2)

    fwd = jax.jit(resdd_forward, static_argnames=("num_classes", "tb"))

    # --- Test 1: small batch (single grid step, tile shrunk to 8 rows) ---
    B1 = 8
    x1 = jax.random.normal(kx, (B1, 28 * 28), jnp.float32)
    out1 = jax.block_until_ready(fwd(x1, w0_t, wdd_t, w2_t))
    ref1 = reference_forward(x1, w_fc0, w_dd, w_dd1, w_fc2)
    assert out1.shape == (B1, 10)
    assert jnp.allclose(out1, ref1, rtol=5e-2, atol=5e-2), "mismatch (small batch)"

    # --- Test 2: multiple grid steps (B > tile) to cover the tiling path ---
    B2 = 40
    x2 = jax.random.normal(kx2, (B2, 28 * 28), jnp.float32)
    out2 = jax.block_until_ready(fwd(x2, w0_t, wdd_t, w2_t, tb=16))
    ref2 = reference_forward(x2, w_fc0, w_dd, w_dd1, w_fc2)
    assert out2.shape == (B2, 10)
    assert jnp.allclose(out2, ref2, rtol=5e-2, atol=5e-2), "mismatch (multi-tile)"

    print("KERNEL_OK")
</pallas_src>

<mosaic_0001>
module attributes {stable_mosaic.version = 11 : i64} {
  func.func @resdd_kernel(%arg0: i32, %arg1: memref<8x784xf32, #tpu.memory_space<vmem>>, %arg2: memref<784x256xbf16, #tpu.memory_space<vmem>>, %arg3: memref<256x512xbf16, #tpu.memory_space<vmem>>, %arg4: memref<256x128xbf16, #tpu.memory_space<vmem>>, %arg5: memref<8x128xf32, #tpu.memory_space<vmem>>) attributes {dimension_semantics = [#tpu.dimension_semantics<parallel>], iteration_bounds = array<i64: 1>, scalar_prefetch = 0 : i64, scratch_operands = 0 : i64, tpu.core_type = #tpu.core_type<tc>, window_params = [{transform_indices = @transform_0, window_bounds = array<i64: 8, 784>}, {pipeline_mode = #tpu.pipeline_mode<synchronous>, transform_indices = @transform_1, window_bounds = array<i64: 784, 256>}, {pipeline_mode = #tpu.pipeline_mode<synchronous>, transform_indices = @transform_2, window_bounds = array<i64: 256, 512>}, {pipeline_mode = #tpu.pipeline_mode<synchronous>, transform_indices = @transform_3, window_bounds = array<i64: 256, 128>}, {transform_indices = @transform_4, window_bounds = array<i64: 8, 128>}]} {
    %c0 = arith.constant 0 : index
    %c0_0 = arith.constant 0 : index
    %0 = vector.load %arg2[%c0, %c0_0] : memref<784x256xbf16, #tpu.memory_space<vmem>>, vector<784x256xbf16>
    %c0_1 = arith.constant 0 : index
    %c0_2 = arith.constant 0 : index
    %1 = vector.load %arg3[%c0_1, %c0_2] : memref<256x512xbf16, #tpu.memory_space<vmem>>, vector<256x512xbf16>
    %c0_3 = arith.constant 0 : index
    %c0_4 = arith.constant 0 : index
    %2 = vector.load %arg4[%c0_3, %c0_4] : memref<256x128xbf16, #tpu.memory_space<vmem>>, vector<256x128xbf16>
    %c0_5 = arith.constant 0 : index
    %c0_6 = arith.constant 0 : index
    %3 = vector.load %arg1[%c0_5, %c0_6] : memref<8x784xf32, #tpu.memory_space<vmem>>, vector<8x784xf32>
    %4 = arith.truncf %3 : vector<8x784xf32> to vector<8x784xbf16>
    %cst = arith.constant dense<0.000000e+00> : vector<8x256xf32>
    %5 = tpu.matmul %4, %0, %cst {dimension_numbers = #tpu.dot_dimension_numbers<[1], [0], [0], [1], [0, 0, 1, 1], [], []>} : vector<8x784xbf16>, vector<784x256xbf16>, vector<8x256xf32> -> vector<8x256xf32>
    %6 = arith.truncf %5 : vector<8x256xf32> to vector<8x256xbf16>
    %cst_7 = arith.constant dense<0.000000e+00> : vector<8x512xf32>
    %7 = tpu.matmul %6, %1, %cst_7 {dimension_numbers = #tpu.dot_dimension_numbers<[1], [0], [0], [1], [0, 0, 1, 1], [], []>} : vector<8x256xbf16>, vector<256x512xbf16>, vector<8x512xf32> -> vector<8x512xf32>
    %8 = vector.extract_strided_slice %7 {offsets = [0, 0], sizes = [8, 256], strides = [1, 1]} : vector<8x512xf32> to vector<8x256xf32>
    %9 = arith.mulf %8, %5 : vector<8x256xf32>
    %10 = vector.extract_strided_slice %7 {offsets = [0, 256], sizes = [8, 256], strides = [1, 1]} : vector<8x512xf32> to vector<8x256xf32>
    %11 = arith.addf %9, %10 : vector<8x256xf32>
    %12 = arith.truncf %11 : vector<8x256xf32> to vector<8x256xbf16>
    %cst_8 = arith.constant dense<0.000000e+00> : vector<8x512xf32>
    %13 = tpu.matmul %12, %1, %cst_8 {dimension_numbers = #tpu.dot_dimension_numbers<[1], [0], [0], [1], [0, 0, 1, 1], [], []>} : vector<8x256xbf16>, vector<256x512xbf16>, vector<8x512xf32> -> vector<8x512xf32>
    %14 = vector.extract_strided_slice %13 {offsets = [0, 0], sizes = [8, 256], strides = [1, 1]} : vector<8x512xf32> to vector<8x256xf32>
    %15 = arith.mulf %14, %5 : vector<8x256xf32>
    %16 = vector.extract_strided_slice %13 {offsets = [0, 256], sizes = [8, 256], strides = [1, 1]} : vector<8x512xf32> to vector<8x256xf32>
    %17 = arith.addf %15, %16 : vector<8x256xf32>
    %18 = arith.truncf %17 : vector<8x256xf32> to vector<8x256xbf16>
    %cst_9 = arith.constant dense<0.000000e+00> : vector<8x512xf32>
    %19 = tpu.matmul %18, %1, %cst_9 {dimension_numbers = #tpu.dot_dimension_numbers<[1], [0], [0], [1], [0, 0, 1, 1], [], []>} : vector<8x256xbf16>, vector<256x512xbf16>, vector<8x512xf32> -> vector<8x512xf32>
    %20 = vector.extract_strided_slice %19 {offsets = [0, 0], sizes = [8, 256], strides = [1, 1]} : vector<8x512xf32> to vector<8x256xf32>
    %21 = arith.mulf %20, %5 : vector<8x256xf32>
    %22 = vector.extract_strided_slice %19 {offsets = [0, 256], sizes = [8, 256], strides = [1, 1]} : vector<8x512xf32> to vector<8x256xf32>
    %23 = arith.addf %21, %22 : vector<8x256xf32>
    %24 = arith.truncf %23 : vector<8x256xf32> to vector<8x256xbf16>
    %cst_10 = arith.constant dense<0.000000e+00> : vector<8x512xf32>
    %25 = tpu.matmul %24, %1, %cst_10 {dimension_numbers = #tpu.dot_dimension_numbers<[1], [0], [0], [1], [0, 0, 1, 1], [], []>} : vector<8x256xbf16>, vector<256x512xbf16>, vector<8x512xf32> -> vector<8x512xf32>
    %26 = vector.extract_strided_slice %25 {offsets = [0, 0], sizes = [8, 256], strides = [1, 1]} : vector<8x512xf32> to vector<8x256xf32>
    %27 = arith.mulf %26, %5 : vector<8x256xf32>
    %28 = vector.extract_strided_slice %25 {offsets = [0, 256], sizes = [8, 256], strides = [1, 1]} : vector<8x512xf32> to vector<8x256xf32>
    %29 = arith.addf %27, %28 : vector<8x256xf32>
    %30 = arith.truncf %29 : vector<8x256xf32> to vector<8x256xbf16>
    %cst_11 = arith.constant dense<0.000000e+00> : vector<8x128xf32>
    %31 = tpu.matmul %30, %2, %cst_11 {dimension_numbers = #tpu.dot_dimension_numbers<[1], [0], [0], [1], [0, 0, 1, 1], [], []>} : vector<8x256xbf16>, vector<256x128xbf16>, vector<8x128xf32> -> vector<8x128xf32>
    %c0_12 = arith.constant 0 : index
    %c0_13 = arith.constant 0 : index
    %32 = vector.load %arg5[%c0_12, %c0_13] : memref<8x128xf32, #tpu.memory_space<vmem>>, vector<8x128xf32>
    tpu.vector_store %arg5[%c0_12, %c0_13], %31 {strides = array<i32>} : memref<8x128xf32, #tpu.memory_space<vmem>>, vector<8x128xf32>,
    return
  }
  func.func @transform_0(%arg0: i32) -> (i32, i32) {
    %c0_i32 = arith.constant 0 : i32
    %c0_i32_0 = arith.constant 0 : i32
    return %arg0, %c0_i32 : i32, i32
  }
  func.func @transform_1(%arg0: i32) -> (i32, i32) {
    %c0_i32 = arith.constant 0 : i32
    %c0_i32_0 = arith.constant 0 : i32
    %c0_i32_1 = arith.constant 0 : i32
    return %c0_i32, %c0_i32_0 : i32, i32
  }
  func.func @transform_2(%arg0: i32) -> (i32, i32) {
    %c0_i32 = arith.constant 0 : i32
    %c0_i32_0 = arith.constant 0 : i32
    %c0_i32_1 = arith.constant 0 : i32
    return %c0_i32, %c0_i32_0 : i32, i32
  }
  func.func @transform_3(%arg0: i32) -> (i32, i32) {
    %c0_i32 = arith.constant 0 : i32
    %c0_i32_0 = arith.constant 0 : i32
    %c0_i32_1 = arith.constant 0 : i32
    return %c0_i32, %c0_i32_0 : i32, i32
  }
  func.func @transform_4(%arg0: i32) -> (i32, i32) {
    %c0_i32 = arith.constant 0 : i32
    %c0_i32_0 = arith.constant 0 : i32
    return %arg0, %c0_i32 : i32, i32
  }
}

</mosaic_0001>

<llo_original>
// kernel: resdd_forward.1
$region0: #{resdd_forward.1}
  #allocation0 [shape = 'u32[]', space=smem, size = 0x4, offset = 0x4, fixed_abs, tag = 'smem constant byte address 0x4 - core index']
  #allocation1 [shape = 'u32[72,128]{1,0:T(1,128)}', space=vmem, size = 0x9000, scoped, tag = 'internal scratch']
  %s0 = inlined_call_operand.hbm [shape: f32[8,784], index: 0, kind: input, shape index: {}]
  %s1 = inlined_call_operand.hbm [shape: bf16[784,256], index: 1, kind: input, shape index: {}]
  %s2 = inlined_call_operand.hbm [shape: bf16[256,512], index: 2, kind: input, shape index: {}]
  %s3 = inlined_call_operand.hbm [shape: bf16[256,128], index: 3, kind: input, shape index: {}]
  %s4 = inlined_call_operand.hbm [shape: f32[8,128], index: 4, kind: output, shape index: {}]
  %s5 = sld [smem:[#allocation0]]
  $region42: #{resdd_forward.1} parent=0
    _
  %s7 = ssub.s32 1, %s5
  %s8 = scalar_select 0, %s7, %s5
  $region1: #{resdd_forward.1} parent=0
    #allocation2 [shape = 'u8[28672]{0}', space=vmem, size = 0x7000, scoped, tag = 'input window, operand 0, single buffered']
    #allocation3 [shape = 's32[1]{0}', space=sflag, size = 0x4, scoped, tag = 'scoped memory for resdd_forward.1']
    #allocation4 [shape = 's32[1]{0}', space=sflag, size = 0x4, scoped, tag = 'scoped memory for resdd_forward.1']
    #allocation5 [shape = 'u8[401408]{0}', space=vmem, size = 0x62000, scoped, tag = 'input window, operand 1, single buffered']
    #allocation6 [shape = 's32[1]{0}', space=sflag, size = 0x4, scoped, tag = 'scoped memory for resdd_forward.1']
    #allocation7 [shape = 'u8[262144]{0}', space=vmem, size = 0x40000, scoped, tag = 'input window, operand 2, single buffered']
    #allocation8 [shape = 'u8[65536]{0}', space=vmem, size = 0x10000, scoped, tag = 'input window, operand 3, single buffered']
    #allocation9 [shape = 's32[1]{0}', space=sflag, size = 0x4, scoped, tag = 'scoped memory for resdd_forward.1']
    #allocation10 [shape = 'u8[4096]{0}', space=vmem, size = 0x1000, scoped, tag = 'output window, operand 0, single buffered']
    %9 = vsyncpa [#allocation3], 0
    %10 = vsyncpa [#allocation6], 0
    %11 = vsyncpa [#allocation9], 0
    %12 = vsyncpa [#allocation4], 0
    // Predicated region
    $region2: #{resdd_forward.1} parent=1 // pred_check
      _
    $region3: #{resdd_forward.1} parent=1 // pred_check_branch
      %14 = sbr.rel (0) target = $region5
    $region4: #{resdd_forward.1} parent=1 // pred_region
      %16 = vsyncadd [#allocation3], 0
      %s18 = sshll.u32 %s0, 4
      %s19 = int_to_ptr.hbm [resolvable:$true] %s18
      %s20 = sshll.u32 [#allocation2], 4
      %s21 = int_to_ptr.vmem [resolvable:$true] %s20
      %23 = dma.hbm_to_vmem [thread:$0]  %s19, 896, %s21, [#allocation3]
    $region5: #{resdd_forward.1} parent=1 // pred_fallthru
      _
    // Predicated region
    $region6: #{resdd_forward.1} parent=1 // pred_check
      _
    $region7: #{resdd_forward.1} parent=1 // pred_check_branch
      %25 = sbr.rel (0) target = $region9
    $region8: #{resdd_forward.1} parent=1 // pred_region
      %27 = vsyncadd [#allocation6], 0
      %s28 = sshll.u32 %s1, 4
      %s29 = int_to_ptr.hbm [resolvable:$true] %s28
      %s30 = sshll.u32 [#allocation5], 4
      %s31 = int_to_ptr.vmem [resolvable:$true] %s30
      %36 = dma.hbm_to_vmem [thread:$0]  %s29, 12544, %s31, [#allocation6], 128, 128, 8
    $region9: #{resdd_forward.1} parent=1 // pred_fallthru
      _
    // Predicated region
    $region10: #{resdd_forward.1} parent=1 // pred_check
      _
    $region11: #{resdd_forward.1} parent=1 // pred_check_branch
      %38 = sbr.rel (0) target = $region13
    $region12: #{resdd_forward.1} parent=1 // pred_region
      %40 = vsyncadd [#allocation6], 0
      %s41 = sshll.u32 %s2, 4
      %s42 = int_to_ptr.hbm [resolvable:$true] %s41
      %s43 = sshll.u32 [#allocation7], 4
      %s44 = int_to_ptr.vmem [resolvable:$true] %s43
      %49 = dma.hbm_to_vmem [thread:$0]  %s42, 8192, %s44, [#allocation6], 256, 256, 16
    $region13: #{resdd_forward.1} parent=1 // pred_fallthru
      _
    // Predicated region
    $region14: #{resdd_forward.1} parent=1 // pred_check
      _
    $region15: #{resdd_forward.1} parent=1 // pred_check_branch
      %51 = sbr.rel (0) target = $region17
    $region16: #{resdd_forward.1} parent=1 // pred_region
      %53 = vsyncadd [#allocation9], 0
      %s54 = sshll.u32 %s3, 4
      %s55 = int_to_ptr.hbm [resolvable:$true] %s54
      %s56 = sshll.u32 [#allocation8], 4
      %s57 = int_to_ptr.vmem [resolvable:$true] %s56
      %62 = dma.hbm_to_vmem [thread:$0]  %s55, 2048, %s57, [#allocation9], 64, 64, 4
    $region17: #{resdd_forward.1} parent=1 // pred_fallthru
      _
    // Predicated region
    $region18: #{resdd_forward.1} parent=1 // pred_check
      _
    $region19: #{resdd_forward.1} parent=1 // pred_check_branch
      %64 = sbr.rel (0) target = $region21
    $region20: #{resdd_forward.1} parent=1 // pred_region
      %66 = dma.done [#allocation3], 896
    $region21: #{resdd_forward.1} parent=1 // pred_fallthru
      _
    // Predicated region
    $region22: #{resdd_forward.1} parent=1 // pred_check
      _
    $region23: #{resdd_forward.1} parent=1 // pred_check_branch
      %68 = sbr.rel (0) target = $region25
    $region24: #{resdd_forward.1} parent=1 // pred_region
      %70 = dma.done [#allocation6], 12544
    $region25: #{resdd_forward.1} parent=1 // pred_fallthru
      _
    // Predicated region
    $region26: #{resdd_forward.1} parent=1 // pred_check
      _
    $region27: #{resdd_forward.1} parent=1 // pred_check_branch
      %72 = sbr.rel (0) target = $region29
    $region28: #{resdd_forward.1} parent=1 // pred_region
      %74 = dma.done [#allocation6], 8192
    $region29: #{resdd_forward.1} parent=1 // pred_fallthru
      _
    // Predicated region
    $region30: #{resdd_forward.1} parent=1 // pred_check
      _
    $region31: #{resdd_forward.1} parent=1 // pred_check_branch
      %76 = sbr.rel (0) target = $region33
    $region32: #{resdd_forward.1} parent=1 // pred_region
      %78 = dma.done [#allocation9], 2048
    $region33: #{resdd_forward.1} parent=1 // pred_fallthru
      _
    %v80 = vld [vmem:[#allocation5] sm:$0xff]
    %v81 = vld [vmem:[#allocation5 + $0x8] sm:$0xff]
    %v82 = vld [vmem:[#allocation5 + $0x10] sm:$0xff]
    %v83 = vld [vmem:[#allocation5 + $0x18] sm:$0xff]
    %v84 = vld [vmem:[#allocation5 + $0x20] sm:$0xff]
    %v85 = vld [vmem:[#allocation5 + $0x28] sm:$0xff]
    %v86 = vld [vmem:[#allocation5 + $0x30] sm:$0xff]
    %v87 = vld [vmem:[#allocation5 + $0x38] sm:$0xff]
    %v88 = vld [vmem:[#allocation5 + $0x40] sm:$0xff]
    %v89 = vld [vmem:[#allocation5 + $0x48] sm:$0xff]
    %v90 = vld [vmem:[#allocation5 + $0x50] sm:$0xff]
    %v91 = vld [vmem:[#allocation5 + $0x58] sm:$0xff]
    %v92 = vld [vmem:[#allocation5 + $0x60] sm:$0xff]
    %v93 = vld [vmem:[#allocation5 + $0x68] sm:$0xff]
    %v94 = vld [vmem:[#allocation5 + $0x70] sm:$0xff]
    %v95 = vld [vmem:[#allocation5 + $0x78] sm:$0xff]
    %v96 = vld [vmem:[#allocation5 + $0x80] sm:$0xff]
    %v97 = vld [vmem:[#allocation5 + $0x88] sm:$0xff]
    %v98 = vld [vmem:[#allocation5 + $0x90] sm:$0xff]
    %v99 = vld [vmem:[#allocation5 + $0x98] sm:$0xff]
    %v100 = vld [vmem:[#allocation5 + $0xa0] sm:$0xff]
    %v101 = vld [vmem:[#allocation5 + $0xa8] sm:$0xff]
    %v102 = vld [vmem:[#allocation5 + $0xb0] sm:$0xff]
    %v103 = vld [vmem:[#allocation5 + $0xb8] sm:$0xff]
    %v104 = vld [vmem:[#allocation5 + $0xc0] sm:$0xff]
    %v105 = vld [vmem:[#allocation5 + $0xc8] sm:$0xff]
    %v106 = vld [vmem:[#allocation5 + $0xd0] sm:$0xff]
    %v107 = vld [vmem:[#allocation5 + $0xd8] sm:$0xff]
    %v108 = vld [vmem:[#allocation5 + $0xe0] sm:$0xff]
    %v109 = vld [vmem:[#allocation5 + $0xe8] sm:$0xff]
    %v110 = vld [vmem:[#allocation5 + $0xf0] sm:$0xff]
    %v111 = vld [vmem:[#allocation5 + $0xf8] sm:$0xff]
    %v112 = vld [vmem:[#allocation5 + $0x100] sm:$0xff]
    %v113 = vld [vmem:[#allocation5 + $0x108] sm:$0xff]
    %v114 = vld [vmem:[#allocation5 + $0x110] sm:$0xff]
    %v115 = vld [vmem:[#allocation5 + $0x118] sm:$0xff]
    %v116 = vld [vmem:[#allocation5 + $0x120] sm:$0xff]
    %v117 = vld [vmem:[#allocation5 + $0x128] sm:$0xff]
    %v118 = vld [vmem:[#allocation5 + $0x130] sm:$0xff]
    %v119 = vld [vmem:[#allocation5 + $0x138] sm:$0xff]
    %v120 = vld [vmem:[#allocation5 + $0x140] sm:$0xff]
    %v121 = vld [vmem:[#allocation5 + $0x148] sm:$0xff]
    %v122 = vld [vmem:[#allocation5 + $0x150] sm:$0xff]
    %v123 = vld [vmem:[#allocation5 + $0x158] sm:$0xff]
    %v124 = vld [vmem:[#allocation5 + $0x160] sm:$0xff]
    %v125 = vld [vmem:[#allocation5 + $0x168] sm:$0xff]
    %v126 = vld [vmem:[#allocation5 + $0x170] sm:$0xff]
    %v127 = vld [vmem:[#allocation5 + $0x178] sm:$0xff]
    %v128 = vld [vmem:[#allocation5 + $0x180] sm:$0xff]
    %v129 = vld [vmem:[#allocation5 + $0x188] sm:$0xff]
    %v130 = vld [vmem:[#allocation5 + $0x190] sm:$0xff]
    %v131 = vld [vmem:[#allocation5 + $0x198] sm:$0xff]
    %v132 = vld [vmem:[#allocation5 + $0x1a0] sm:$0xff]
    %v133 = vld [vmem:[#allocation5 + $0x1a8] sm:$0xff]
    %v134 = vld [vmem:[#allocation5 + $0x1b0] sm:$0xff]
    %v135 = vld [vmem:[#allocation5 + $0x1b8] sm:$0xff]
    %v136 = vld [vmem:[#allocation5 + $0x1c0] sm:$0xff]
    %v137 = vld [vmem:[#allocation5 + $0x1c8] sm:$0xff]
    %v138 = vld [vmem:[#allocation5 + $0x1d0] sm:$0xff]
    %v139 = vld [vmem:[#allocation5 + $0x1d8] sm:$0xff]
    %v140 = vld [vmem:[#allocation5 + $0x1e0] sm:$0xff]
    %v141 = vld [vmem:[#allocation5 + $0x1e8] sm:$0xff]
    %v142 = vld [vmem:[#allocation5 + $0x1f0] sm:$0xff]
    %v143 = vld [vmem:[#allocation5 + $0x1f8] sm:$0xff]
    %v144 = vld [vmem:[#allocation5 + $0x200] sm:$0xff]
    %v145 = vld [vmem:[#allocation5 + $0x208] sm:$0xff]
    %v146 = vld [vmem:[#allocation5 + $0x210] sm:$0xff]
    %v147 = vld [vmem:[#allocation5 + $0x218] sm:$0xff]
    %v148 = vld [vmem:[#allocation5 + $0x220] sm:$0xff]
    %v149 = vld [vmem:[#allocation5 + $0x228] sm:$0xff]
    %v150 = vld [vmem:[#allocation5 + $0x230] sm:$0xff]
    %v151 = vld [vmem:[#allocation5 + $0x238] sm:$0xff]
    %v152 = vld [vmem:[#allocation5 + $0x240] sm:$0xff]
    %v153 = vld [vmem:[#allocation5 + $0x248] sm:$0xff]
    %v154 = vld [vmem:[#allocation5 + $0x250] sm:$0xff]
    %v155 = vld [vmem:[#allocation5 + $0x258] sm:$0xff]
    %v156 = vld [vmem:[#allocation5 + $0x260] sm:$0xff]
    %v157 = vld [vmem:[#allocation5 + $0x268] sm:$0xff]
    %v158 = vld [vmem:[#allocation5 + $0x270] sm:$0xff]
    %v159 = vld [vmem:[#allocation5 + $0x278] sm:$0xff]
    %v160 = vld [vmem:[#allocation5 + $0x280] sm:$0xff]
    %v161 = vld [vmem:[#allocation5 + $0x288] sm:$0xff]
    %v162 = vld [vmem:[#allocation5 + $0x290] sm:$0xff]
    %v163 = vld [vmem:[#allocation5 + $0x298] sm:$0xff]
    %v164 = vld [vmem:[#allocation5 + $0x2a0] sm:$0xff]
    %v165 = vld [vmem:[#allocation5 + $0x2a8] sm:$0xff]
    %v166 = vld [vmem:[#allocation5 + $0x2b0] sm:$0xff]
    %v167 = vld [vmem:[#allocation5 + $0x2b8] sm:$0xff]
    %v168 = vld [vmem:[#allocation5 + $0x2c0] sm:$0xff]
    %v169 = vld [vmem:[#allocation5 + $0x2c8] sm:$0xff]
    %v170 = vld [vmem:[#allocation5 + $0x2d0] sm:$0xff]
    %v171 = vld [vmem:[#allocation5 + $0x2d8] sm:$0xff]
    %v172 = vld [vmem:[#allocation5 + $0x2e0] sm:$0xff]
    %v173 = vld [vmem:[#allocation5 + $0x2e8] sm:$0xff]
    %v174 = vld [vmem:[#allocation5 + $0x2f0] sm:$0xff]
    %v175 = vld [vmem:[#allocation5 + $0x2f8] sm:$0xff]
    %v176 = vld [vmem:[#allocation5 + $0x300] sm:$0xff]
    %v177 = vld [vmem:[#allocation5 + $0x308] sm:$0xff]
    %v178 = vld [vmem:[#allocation7] sm:$0xff]
    %v179 = vld [vmem:[#allocation7 + $0x8] sm:$0xff]
    %v180 = vld [vmem:[#allocation7 + $0x10] sm:$0xff]
    %v181 = vld [vmem:[#allocation7 + $0x18] sm:$0xff]
    %v182 = vld [vmem:[#allocation7 + $0x20] sm:$0xff]
    %v183 = vld [vmem:[#allocation7 + $0x28] sm:$0xff]
    %v184 = vld [vmem:[#allocation7 + $0x30] sm:$0xff]
    %v185 = vld [vmem:[#allocation7 + $0x38] sm:$0xff]
    %v186 = vld [vmem:[#allocation7 + $0x40] sm:$0xff]
    %v187 = vld [vmem:[#allocation7 + $0x48] sm:$0xff]
    %v188 = vld [vmem:[#allocation7 + $0x50] sm:$0xff]
    %v189 = vld [vmem:[#allocation7 + $0x58] sm:$0xff]
    %v190 = vld [vmem:[#allocation7 + $0x60] sm:$0xff]
    %v191 = vld [vmem:[#allocation7 + $0x68] sm:$0xff]
    %v192 = vld [vmem:[#allocation7 + $0x70] sm:$0xff]
    %v193 = vld [vmem:[#allocation7 + $0x78] sm:$0xff]
    %v194 = vld [vmem:[#allocation7 + $0x80] sm:$0xff]
    %v195 = vld [vmem:[#allocation7 + $0x88] sm:$0xff]
    %v196 = vld [vmem:[#allocation7 + $0x90] sm:$0xff]
    %v197 = vld [vmem:[#allocation7 + $0x98] sm:$0xff]
    %v198 = vld [vmem:[#allocation7 + $0xa0] sm:$0xff]
    %v199 = vld [vmem:[#allocation7 + $0xa8] sm:$0xff]
    %v200 = vld [vmem:[#allocation7 + $0xb0] sm:$0xff]
    %v201 = vld [vmem:[#allocation7 + $0xb8] sm:$0xff]
    %v202 = vld [vmem:[#allocation7 + $0xc0] sm:$0xff]
    %v203 = vld [vmem:[#allocation7 + $0xc8] sm:$0xff]
    %v204 = vld [vmem:[#allocation7 + $0xd0] sm:$0xff]
    %v205 = vld [vmem:[#allocation7 + $0xd8] sm:$0xff]
    %v206 = vld [vmem:[#allocation7 + $0xe0] sm:$0xff]
    %v207 = vld [vmem:[#allocation7 + $0xe8] sm:$0xff]
    %v208 = vld [vmem:[#allocation7 + $0xf0] sm:$0xff]
    %v209 = vld [vmem:[#allocation7 + $0xf8] sm:$0xff]
    %v210 = vld [vmem:[#allocation7 + $0x100] sm:$0xff]
    %v211 = vld [vmem:[#allocation7 + $0x108] sm:$0xff]
    %v212 = vld [vmem:[#allocation7 + $0x110] sm:$0xff]
    %v213 = vld [vmem:[#allocation7 + $0x118] sm:$0xff]
    %v214 = vld [vmem:[#allocation7 + $0x120] sm:$0xff]
    %v215 = vld [vmem:[#allocation7 + $0x128] sm:$0xff]
    %v216 = vld [vmem:[#allocation7 + $0x130] sm:$0xff]
    %v217 = vld [vmem:[#allocation7 + $0x138] sm:$0xff]
    %v218 = vld [vmem:[#allocation7 + $0x140] sm:$0xff]
    %v219 = vld [vmem:[#allocation7 + $0x148] sm:$0xff]
    %v220 = vld [vmem:[#allocation7 + $0x150] sm:$0xff]
    %v221 = vld [vmem:[#allocation7 + $0x158] sm:$0xff]
    %v222 = vld [vmem:[#allocation7 + $0x160] sm:$0xff]
    %v223 = vld [vmem:[#allocation7 + $0x168] sm:$0xff]
    %v224 = vld [vmem:[#allocation7 + $0x170] sm:$0xff]
    %v225 = vld [vmem:[#allocation7 + $0x178] sm:$0xff]
    %v226 = vld [vmem:[#allocation7 + $0x180] sm:$0xff]
    %v227 = vld [vmem:[#allocation7 + $0x188] sm:$0xff]
    %v228 = vld [vmem:[#allocation7 + $0x190] sm:$0xff]
    %v229 = vld [vmem:[#allocation7 + $0x198] sm:$0xff]
    %v230 = vld [vmem:[#allocation7 + $0x1a0] sm:$0xff]
    %v231 = vld [vmem:[#allocation7 + $0x1a8] sm:$0xff]
    %v232 = vld [vmem:[#allocation7 + $0x1b0] sm:$0xff]
    %v233 = vld [vmem:[#allocation7 + $0x1b8] sm:$0xff]
    %v234 = vld [vmem:[#allocation7 + $0x1c0] sm:$0xff]
    %v235 = vld [vmem:[#allocation7 + $0x1c8] sm:$0xff]
    %v236 = vld [vmem:[#allocation7 + $0x1d0] sm:$0xff]
    %v237 = vld [vmem:[#allocation7 + $0x1d8] sm:$0xff]
    %v238 = vld [vmem:[#allocation7 + $0x1e0] sm:$0xff]
    %v239 = vld [vmem:[#allocation7 + $0x1e8] sm:$0xff]
    %v240 = vld [vmem:[#allocation7 + $0x1f0] sm:$0xff]
    %v241 = vld [vmem:[#allocation7 + $0x1f8] sm:$0xff]
    %v242 = vld [vmem:[#allocation8] sm:$0xf]
    %v243 = vld [vmem:[#allocation8 + $0x4] sm:$0xf]
    %v244 = vld [vmem:[#allocation8 + $0x8] sm:$0xf]
    %v245 = vld [vmem:[#allocation8 + $0xc] sm:$0xf]
    %v246 = vld [vmem:[#allocation8 + $0x10] sm:$0xf]
    %v247 = vld [vmem:[#allocation8 + $0x14] sm:$0xf]
    %v248 = vld [vmem:[#allocation8 + $0x18] sm:$0xf]
    %v249 = vld [vmem:[#allocation8 + $0x1c] sm:$0xf]
    %v250 = vld [vmem:[#allocation8 + $0x20] sm:$0xf]
    %v251 = vld [vmem:[#allocation8 + $0x24] sm:$0xf]
    %v252 = vld [vmem:[#allocation8 + $0x28] sm:$0xf]
    %v253 = vld [vmem:[#allocation8 + $0x2c] sm:$0xf]
    %v254 = vld [vmem:[#allocation8 + $0x30] sm:$0xf]
    %v255 = vld [vmem:[#allocation8 + $0x34] sm:$0xf]
    %v256 = vld [vmem:[#allocation8 + $0x38] sm:$0xf]
    %v257 = vld [vmem:[#allocation8 + $0x3c] sm:$0xf]
    %v258 = vld [vmem:[#allocation8 + $0x40] sm:$0xf]
    %v259 = vld [vmem:[#allocation8 + $0x44] sm:$0xf]
    %v260 = vld [vmem:[#allocation8 + $0x48] sm:$0xf]
    %v261 = vld [vmem:[#allocation8 + $0x4c] sm:$0xf]
    %v262 = vld [vmem:[#allocation8 + $0x50] sm:$0xf]
    %v263 = vld [vmem:[#allocation8 + $0x54] sm:$0xf]
    %v264 = vld [vmem:[#allocation8 + $0x58] sm:$0xf]
    %v265 = vld [vmem:[#allocation8 + $0x5c] sm:$0xf]
    %v266 = vld [vmem:[#allocation8 + $0x60] sm:$0xf]
    %v267 = vld [vmem:[#allocation8 + $0x64] sm:$0xf]
    %v268 = vld [vmem:[#allocation8 + $0x68] sm:$0xf]
    %v269 = vld [vmem:[#allocation8 + $0x6c] sm:$0xf]
    %v270 = vld [vmem:[#allocation8 + $0x70] sm:$0xf]
    %v271 = vld [vmem:[#allocation8 + $0x74] sm:$0xf]
    %v272 = vld [vmem:[#allocation8 + $0x78] sm:$0xf]
    %v273 = vld [vmem:[#allocation8 + $0x7c] sm:$0xf]
    %v274 = vld [vmem:[#allocation2] sm:$0xff]
    %v275 = vld [vmem:[#allocation2 + $0x8] sm:$0xff]
    %v276 = vld [vmem:[#allocation2 + $0x10] sm:$0xff]
    %v277 = vld [vmem:[#allocation2 + $0x18] sm:$0xff]
    %v278 = vld [vmem:[#allocation2 + $0x20] sm:$0xff]
    %v279 = vld [vmem:[#allocation2 + $0x28] sm:$0xff]
    %v280 = vld [vmem:[#allocation2 + $0x30] sm:$0xff]
    %v281 = vpack.c.bf16 %v274, %v274
    %v282 = vpack.c.bf16 %v275, %v275
    %v283 = vpack.c.bf16 %v276, %v276
    %v284 = vpack.c.bf16 %v277, %v277
    %v285 = vpack.c.bf16 %v278, %v278
    %v286 = vpack.c.bf16 %v279, %v279
    %v287 = vpack.c.bf16 %v280, %v280
    %v386 = vunpack.c.l.b16 %v80
    %v387 = vunpack.c.h.b16 %v80
    %v388 = vunpack.c.l.b16 %v81
    %v389 = vunpack.c.h.b16 %v81
    %v390 = vunpack.c.l.b16 %v82
    %v391 = vunpack.c.h.b16 %v82
    %v392 = vunpack.c.l.b16 %v83
    %v393 = vunpack.c.h.b16 %v83
    %v394 = vunpack.c.l.b16 %v84
    %v395 = vunpack.c.h.b16 %v84
    %v396 = vunpack.c.l.b16 %v85
    %v397 = vunpack.c.h.b16 %v85
    %v398 = vunpack.c.l.b16 %v86
    %v399 = vunpack.c.h.b16 %v86
    %v400 = vunpack.c.l.b16 %v87
    %v401 = vunpack.c.h.b16 %v87
    %v402 = vunpack.c.l.b16 %v88
    %v403 = vunpack.c.h.b16 %v88
    %v404 = vunpack.c.l.b16 %v89
    %v405 = vunpack.c.h.b16 %v89
    %v406 = vunpack.c.l.b16 %v90
    %v407 = vunpack.c.h.b16 %v90
    %v408 = vunpack.c.l.b16 %v91
    %v409 = vunpack.c.h.b16 %v91
    %v410 = vunpack.c.l.b16 %v92
    %v411 = vunpack.c.h.b16 %v92
    %v412 = vunpack.c.l.b16 %v93
    %v413 = vunpack.c.h.b16 %v93
    %v414 = vunpack.c.l.b16 %v94
    %v415 = vunpack.c.h.b16 %v94
    %v416 = vunpack.c.l.b16 %v95
    %v417 = vunpack.c.h.b16 %v95
    %v418 = vunpack.c.l.b16 %v96
    %v419 = vunpack.c.h.b16 %v96
    %v420 = vunpack.c.l.b16 %v97
    %v421 = vunpack.c.h.b16 %v97
    %v422 = vunpack.c.l.b16 %v98
    %v423 = vunpack.c.h.b16 %v98
    %v424 = vunpack.c.l.b16 %v99
    %v425 = vunpack.c.h.b16 %v99
    %v426 = vunpack.c.l.b16 %v100
    %v427 = vunpack.c.h.b16 %v100
    %v428 = vunpack.c.l.b16 %v101
    %v429 = vunpack.c.h.b16 %v101
    %v430 = vunpack.c.l.b16 %v102
    %v431 = vunpack.c.h.b16 %v102
    %v432 = vunpack.c.l.b16 %v103
    %v433 = vunpack.c.h.b16 %v103
    %v434 = vunpack.c.l.b16 %v104
    %v435 = vunpack.c.h.b16 %v104
    %v436 = vunpack.c.l.b16 %v105
    %v437 = vunpack.c.h.b16 %v105
    %v438 = vunpack.c.l.b16 %v106
    %v439 = vunpack.c.h.b16 %v106
    %v440 = vunpack.c.l.b16 %v107
    %v441 = vunpack.c.h.b16 %v107
    %v442 = vunpack.c.l.b16 %v108
    %v443 = vunpack.c.h.b16 %v108
    %v444 = vunpack.c.l.b16 %v109
    %v445 = vunpack.c.h.b16 %v109
    %v446 = vunpack.c.l.b16 %v110
    %v447 = vunpack.c.h.b16 %v110
    %v448 = vunpack.c.l.b16 %v111
    %v449 = vunpack.c.h.b16 %v111
    %v450 = vunpack.c.l.b16 %v112
    %v451 = vunpack.c.h.b16 %v112
    %v452 = vunpack.c.l.b16 %v113
    %v453 = vunpack.c.h.b16 %v113
    %v454 = vunpack.c.l.b16 %v114
    %v455 = vunpack.c.h.b16 %v114
    %v456 = vunpack.c.l.b16 %v115
    %v457 = vunpack.c.h.b16 %v115
    %v458 = vunpack.c.l.b16 %v116
    %v459 = vunpack.c.h.b16 %v116
    %v460 = vunpack.c.l.b16 %v117
    %v461 = vunpack.c.h.b16 %v117
    %v462 = vunpack.c.l.b16 %v118
    %v463 = vunpack.c.h.b16 %v118
    %v464 = vunpack.c.l.b16 %v119
    %v465 = vunpack.c.h.b16 %v119
    %v466 = vunpack.c.l.b16 %v120
    %v467 = vunpack.c.h.b16 %v120
    %v468 = vunpack.c.l.b16 %v121
    %v469 = vunpack.c.h.b16 %v121
    %v470 = vunpack.c.l.b16 %v122
    %v471 = vunpack.c.h.b16 %v122
    %v472 = vunpack.c.l.b16 %v123
    %v473 = vunpack.c.h.b16 %v123
    %v474 = vunpack.c.l.b16 %v124
    %v475 = vunpack.c.h.b16 %v124
    %v476 = vunpack.c.l.b16 %v125
    %v477 = vunpack.c.h.b16 %v125
    %v478 = vunpack.c.l.b16 %v126
    %v479 = vunpack.c.h.b16 %v126
    %v480 = vunpack.c.l.b16 %v127
    %v481 = vunpack.c.h.b16 %v127
    %v482 = vunpack.c.l.b16 %v128
    %v483 = vunpack.c.h.b16 %v128
    %v484 = vunpack.c.l.b16 %v129
    %v485 = vunpack.c.h.b16 %v129
    %v486 = vunpack.c.l.b16 %v130
    %v487 = vunpack.c.h.b16 %v130
    %v488 = vunpack.c.l.b16 %v131
    %v489 = vunpack.c.h.b16 %v131
    %v490 = vunpack.c.l.b16 %v132
    %v491 = vunpack.c.h.b16 %v132
    %v492 = vunpack.c.l.b16 %v133
    %v493 = vunpack.c.h.b16 %v133
    %v494 = vunpack.c.l.b16 %v134
    %v495 = vunpack.c.h.b16 %v134
    %v496 = vunpack.c.l.b16 %v135
    %v497 = vunpack.c.h.b16 %v135
    %v498 = vunpack.c.l.b16 %v136
    %v499 = vunpack.c.h.b16 %v136
    %v500 = vunpack.c.l.b16 %v137
    %v501 = vunpack.c.h.b16 %v137
    %v502 = vunpack.c.l.b16 %v138
    %v503 = vunpack.c.h.b16 %v138
    %v504 = vunpack.c.l.b16 %v139
    %v505 = vunpack.c.h.b16 %v139
    %v506 = vunpack.c.l.b16 %v140
    %v507 = vunpack.c.h.b16 %v140
    %v508 = vunpack.c.l.b16 %v141
    %v509 = vunpack.c.h.b16 %v141
    %v510 = vunpack.c.l.b16 %v142
    %v511 = vunpack.c.h.b16 %v142
    %v512 = vunpack.c.l.b16 %v143
    %v513 = vunpack.c.h.b16 %v143
    %v514 = vunpack.c.l.b16 %v144
    %v515 = vunpack.c.h.b16 %v144
    %v516 = vunpack.c.l.b16 %v145
    %v517 = vunpack.c.h.b16 %v145
    %v518 = vunpack.c.l.b16 %v146
    %v519 = vunpack.c.h.b16 %v146
    %v520 = vunpack.c.l.b16 %v147
    %v521 = vunpack.c.h.b16 %v147
    %v522 = vunpack.c.l.b16 %v148
    %v523 = vunpack.c.h.b16 %v148
    %v524 = vunpack.c.l.b16 %v149
    %v525 = vunpack.c.h.b16 %v149
    %v526 = vunpack.c.l.b16 %v150
    %v527 = vunpack.c.h.b16 %v150
    %v528 = vunpack.c.l.b16 %v151
    %v529 = vunpack.c.h.b16 %v151
    %v530 = vunpack.c.l.b16 %v152
    %v531 = vunpack.c.h.b16 %v152
    %v532 = vunpack.c.l.b16 %v153
    %v533 = vunpack.c.h.b16 %v153
    %v534 = vunpack.c.l.b16 %v154
    %v535 = vunpack.c.h.b16 %v154
    %v536 = vunpack.c.l.b16 %v155
    %v537 = vunpack.c.h.b16 %v155
    %v538 = vunpack.c.l.b16 %v156
    %v539 = vunpack.c.h.b16 %v156
    %v540 = vunpack.c.l.b16 %v157
    %v541 = vunpack.c.h.b16 %v157
    %v542 = vunpack.c.l.b16 %v158
    %v543 = vunpack.c.h.b16 %v158
    %v544 = vunpack.c.l.b16 %v159
    %v545 = vunpack.c.h.b16 %v159
    %v546 = vunpack.c.l.b16 %v160
    %v547 = vunpack.c.h.b16 %v160
    %v548 = vunpack.c.l.b16 %v161
    %v549 = vunpack.c.h.b16 %v161
    %v550 = vunpack.c.l.b16 %v162
    %v551 = vunpack.c.h.b16 %v162
    %v552 = vunpack.c.l.b16 %v163
    %v553 = vunpack.c.h.b16 %v163
    %v554 = vunpack.c.l.b16 %v164
    %v555 = vunpack.c.h.b16 %v164
    %v556 = vunpack.c.l.b16 %v165
    %v557 = vunpack.c.h.b16 %v165
    %v558 = vunpack.c.l.b16 %v166
    %v559 = vunpack.c.h.b16 %v166
    %v560 = vunpack.c.l.b16 %v167
    %v561 = vunpack.c.h.b16 %v167
    %v562 = vunpack.c.l.b16 %v168
    %v563 = vunpack.c.h.b16 %v168
    %v564 = vunpack.c.l.b16 %v169
    %v565 = vunpack.c.h.b16 %v169
    %v566 = vunpack.c.l.b16 %v170
    %v567 = vunpack.c.h.b16 %v170
    %v568 = vunpack.c.l.b16 %v171
    %v569 = vunpack.c.h.b16 %v171
    %v570 = vunpack.c.l.b16 %v172
    %v571 = vunpack.c.h.b16 %v172
    %v572 = vunpack.c.l.b16 %v173
    %v573 = vunpack.c.h.b16 %v173
    %v574 = vunpack.c.l.b16 %v174
    %v575 = vunpack.c.h.b16 %v174
    %v576 = vunpack.c.l.b16 %v175
    %v577 = vunpack.c.h.b16 %v175
    %v578 = vunpack.c.l.b16 %v176
    %v579 = vunpack.c.h.b16 %v176
    %v580 = vunpack.c.l.b16 %v177
    %v581 = vunpack.c.h.b16 %v177
    %v582 = vpack.c.b16 %v388, %v386
    %v583 = vpack.c.b16 %v389, %v387
    %v584 = vpack.c.b16 %v392, %v390
    %v585 = vpack.c.b16 %v393, %v391
    %v586 = vpack.c.b16 %v396, %v394
    %v587 = vpack.c.b16 %v397, %v395
    %v588 = vpack.c.b16 %v400, %v398
    %v589 = vpack.c.b16 %v401, %v399
    %v590 = vpack.c.b16 %v404, %v402
    %v591 = vpack.c.b16 %v405, %v403
    %v592 = vpack.c.b16 %v408, %v406
    %v593 = vpack.c.b16 %v409, %v407
    %v594 = vpack.c.b16 %v412, %v410
    %v595 = vpack.c.b16 %v413, %v411
    %v596 = vpack.c.b16 %v416, %v414
    %v597 = vpack.c.b16 %v417, %v415
    %v598 = vpack.c.b16 %v420, %v418
    %v599 = vpack.c.b16 %v421, %v419
    %v600 = vpack.c.b16 %v424, %v422
    %v601 = vpack.c.b16 %v425, %v423
    %v602 = vpack.c.b16 %v428, %v426
    %v603 = vpack.c.b16 %v429, %v427
    %v604 = vpack.c.b16 %v432, %v430
    %v605 = vpack.c.b16 %v433, %v431
    %v606 = vpack.c.b16 %v436, %v434
    %v607 = vpack.c.b16 %v437, %v435
    %v608 = vpack.c.b16 %v440, %v438
    %v609 = vpack.c.b16 %v441, %v439
    %v610 = vpack.c.b16 %v444, %v442
    %v611 = vpack.c.b16 %v445, %v443
    %v612 = vpack.c.b16 %v448, %v446
    %v613 = vpack.c.b16 %v449, %v447
    %v614 = vpack.c.b16 %v452, %v450
    %v615 = vpack.c.b16 %v453, %v451
    %v616 = vpack.c.b16 %v456, %v454
    %v617 = vpack.c.b16 %v457, %v455
    %v618 = vpack.c.b16 %v460, %v458
    %v619 = vpack.c.b16 %v461, %v459
    %v620 = vpack.c.b16 %v464, %v462
    %v621 = vpack.c.b16 %v465, %v463
    %v622 = vpack.c.b16 %v468, %v466
    %v623 = vpack.c.b16 %v469, %v467
    %v624 = vpack.c.b16 %v472, %v470
    %v625 = vpack.c.b16 %v473, %v471
    %v626 = vpack.c.b16 %v476, %v474
    %v627 = vpack.c.b16 %v477, %v475
    %v628 = vpack.c.b16 %v480, %v478
    %v629 = vpack.c.b16 %v481, %v479
    %v630 = vpack.c.b16 %v484, %v482
    %v631 = vpack.c.b16 %v485, %v483
    %v632 = vpack.c.b16 %v488, %v486
    %v633 = vpack.c.b16 %v489, %v487
    %v634 = vpack.c.b16 %v492, %v490
    %v635 = vpack.c.b16 %v493, %v491
    %v636 = vpack.c.b16 %v496, %v494
    %v637 = vpack.c.b16 %v497, %v495
    %v638 = vpack.c.b16 %v500, %v498
    %v639 = vpack.c.b16 %v501, %v499
    %v640 = vpack.c.b16 %v504, %v502
    %v641 = vpack.c.b16 %v505, %v503
    %v642 = vpack.c.b16 %v508, %v506
    %v643 = vpack.c.b16 %v509, %v507
    %v644 = vpack.c.b16 %v512, %v510
    %v645 = vpack.c.b16 %v513, %v511
    %v646 = vpack.c.b16 %v516, %v514
    %v647 = vpack.c.b16 %v517, %v515
    %v648 = vpack.c.b16 %v520, %v518
    %v649 = vpack.c.b16 %v521, %v519
    %v650 = vpack.c.b16 %v524, %v522
    %v651 = vpack.c.b16 %v525, %v523
    %v652 = vpack.c.b16 %v528, %v526
    %v653 = vpack.c.b16 %v529, %v527
    %v654 = vpack.c.b16 %v532, %v530
    %v655 = vpack.c.b16 %v533, %v531
    %v656 = vpack.c.b16 %v536, %v534
    %v657 = vpack.c.b16 %v537, %v535
    %v658 = vpack.c.b16 %v540, %v538
    %v659 = vpack.c.b16 %v541, %v539
    %v660 = vpack.c.b16 %v544, %v542
    %v661 = vpack.c.b16 %v545, %v543
    %v662 = vpack.c.b16 %v548, %v546
    %v663 = vpack.c.b16 %v549, %v547
    %v664 = vpack.c.b16 %v552, %v550
    %v665 = vpack.c.b16 %v553, %v551
    %v666 = vpack.c.b16 %v556, %v554
    %v667 = vpack.c.b16 %v557, %v555
    %v668 = vpack.c.b16 %v560, %v558
    %v669 = vpack.c.b16 %v561, %v559
    %v670 = vpack.c.b16 %v564, %v562
    %v671 = vpack.c.b16 %v565, %v563
    %v672 = vpack.c.b16 %v568, %v566
    %v673 = vpack.c.b16 %v569, %v567
    %v674 = vpack.c.b16 %v572, %v570
    %v675 = vpack.c.b16 %v573, %v571
    %v676 = vpack.c.b16 %v576, %v574
    %v677 = vpack.c.b16 %v577, %v575
    %v678 = vpack.c.b16 %v580, %v578
    %v679 = vpack.c.b16 %v581, %v579
    %vm778 = vcmask 130048
    %v780 = vsel %vm778, %v287, 0
    %782 = vmatpush.bf16.msra.mxu0 %v596
    %783 = vmatpush.bf16.msra.mxu0 %v594
    %784 = vmatpush.bf16.msra.mxu0 %v592
    %785 = vmatpush.bf16.msra.mxu0 %v590
    %786 = vmatpush.bf16.msra.mxu0 %v588
    %787 = vmatpush.bf16.msra.mxu0 %v586
    %788 = vmatpush.bf16.msra.mxu0 %v584
    %789 = vmatpush.bf16.msra.mxu0 %v582
    %790 = vmatmul.bf16.gmra.mxu0 %v281
    %v791 = vpop.f32.mrf.mxu0
    %v792 = vadd.f32 0.0, %v791
    %v793 = vpop.f32.mrf.mxu0
    %794 = vdwg.mxu0
    %795 = vmatpush.bf16.msra.mxu0 %v612
    %796 = vmatpush.bf16.msra.mxu0 %v610
    %797 = vmatpush.bf16.msra.mxu0 %v608
    %798 = vmatpush.bf16.msra.mxu0 %v606
    %799 = vmatpush.bf16.msra.mxu0 %v604
    %800 = vmatpush.bf16.msra.mxu0 %v602
    %801 = vmatpush.bf16.msra.mxu0 %v600
    %802 = vmatpush.bf16.msra.mxu0 %v598
    %803 = vmatmul.bf16.gmra.mxu0 %v282
    %v804 = vpop.f32.mrf.mxu0
    %v805 = vadd.f32 %v792, %v804
    %v806 = vpop.f32.mrf.mxu0
    %807 = vdwg.mxu0
    %808 = vmatpush.bf16.msra.mxu0 %v628
    %809 = vmatpush.bf16.msra.mxu0 %v626
    %810 = vmatpush.bf16.msra.mxu0 %v624
    %811 = vmatpush.bf16.msra.mxu0 %v622
    %812 = vmatpush.bf16.msra.mxu0 %v620
    %813 = vmatpush.bf16.msra.mxu0 %v618
    %814 = vmatpush.bf16.msra.mxu0 %v616
    %815 = vmatpush.bf16.msra.mxu0 %v614
    %816 = vmatmul.bf16.gmra.mxu0 %v283
    %v817 = vpop.f32.mrf.mxu0
    %v818 = vadd.f32 %v805, %v817
    %v819 = vpop.f32.mrf.mxu0
    %820 = vdwg.mxu0
    %821 = vmatpush.bf16.msra.mxu0 %v644
    %822 = vmatpush.bf16.msra.mxu0 %v642
    %823 = vmatpush.bf16.msra.mxu0 %v640
    %824 = vmatpush.bf16.msra.mxu0 %v638
    %825 = vmatpush.bf16.msra.mxu0 %v636
    %826 = vmatpush.bf16.msra.mxu0 %v634
    %827 = vmatpush.bf16.msra.mxu0 %v632
    %828 = vmatpush.bf16.msra.mxu0 %v630
    %829 = vmatmul.bf16.gmra.mxu0 %v284
    %v830 = vpop.f32.mrf.mxu0
    %v831 = vadd.f32 %v818, %v830
    %v832 = vpop.f32.mrf.mxu0
    %833 = vdwg.mxu0
    %834 = vmatpush.bf16.msra.mxu0 %v660
    %835 = vmatpush.bf16.msra.mxu0 %v658
    %836 = vmatpush.bf16.msra.mxu0 %v656
    %837 = vmatpush.bf16.msra.mxu0 %v654
    %838 = vmatpush.bf16.msra.mxu0 %v652
    %839 = vmatpush.bf16.msra.mxu0 %v650
    %840 = vmatpush.bf16.msra.mxu0 %v648
    %841 = vmatpush.bf16.msra.mxu0 %v646
    %842 = vmatmul.bf16.gmra.mxu0 %v285
    %v843 = vpop.f32.mrf.mxu0
    %v844 = vadd.f32 %v831, %v843
    %v845 = vpop.f32.mrf.mxu0
    %846 = vdwg.mxu0
    %847 = vmatpush.bf16.msra.mxu0 %v676
    %848 = vmatpush.bf16.msra.mxu0 %v674
    %849 = vmatpush.bf16.msra.mxu0 %v672
    %850 = vmatpush.bf16.msra.mxu0 %v670
    %851 = vmatpush.bf16.msra.mxu0 %v668
    %852 = vmatpush.bf16.msra.mxu0 %v666
    %853 = vmatpush.bf16.msra.mxu0 %v664
    %854 = vmatpush.bf16.msra.mxu0 %v662
    %855 = vmatmul.bf16.gmra.mxu0 %v286
    %v856 = vpop.f32.mrf.mxu0
    %v857 = vadd.f32 %v844, %v856
    %v858 = vpop.f32.mrf.mxu0
    %859 = vdwg.mxu0
    %860 = vmatpush.bf16.msra.mxu0 0
    %861 = vmatpush.bf16.msra.mxu0 0
    %862 = vmatpush.bf16.msra.mxu0 0
    %863 = vmatpush.bf16.msra.mxu0 0
    %864 = vmatpush.bf16.msra.mxu0 0
    %865 = vmatpush.bf16.msra.mxu0 0
    %866 = vmatpush.bf16.msra.mxu0 0
    %867 = vmatpush.bf16.msra.mxu0 %v678
    %868 = vmatmul.bf16.gmra.mxu0 %v780
    %v869 = vpop.f32.mrf.mxu0
    %v870 = vadd.f32 %v857, %v869
    %v871 = vpop.f32.mrf.mxu0
    %872 = vdwg.mxu0
    %873 = vmatpush.bf16.msra.mxu0 %v597
    %874 = vmatpush.bf16.msra.mxu0 %v595
    %875 = vmatpush.bf16.msra.mxu0 %v593
    %876 = vmatpush.bf16.msra.mxu0 %v591
    %877 = vmatpush.bf16.msra.mxu0 %v589
    %878 = vmatpush.bf16.msra.mxu0 %v587
    %879 = vmatpush.bf16.msra.mxu0 %v585
    %880 = vmatpush.bf16.msra.mxu0 %v583
    %881 = vmatmul.bf16.gmra.mxu0 %v281
    %v882 = vpop.f32.mrf.mxu0
    %v883 = vadd.f32 0.0, %v882
    %v884 = vpop.f32.mrf.mxu0
    %885 = vdwg.mxu0
    %886 = vmatpush.bf16.msra.mxu0 %v613
    %887 = vmatpush.bf16.msra.mxu0 %v611
    %888 = vmatpush.bf16.msra.mxu0 %v609
    %889 = vmatpush.bf16.msra.mxu0 %v607
    %890 = vmatpush.bf16.msra.mxu0 %v605
    %891 = vmatpush.bf16.msra.mxu0 %v603
    %892 = vmatpush.bf16.msra.mxu0 %v601
    %893 = vmatpush.bf16.msra.mxu0 %v599
    %894 = vmatmul.bf16.gmra.mxu0 %v282
    %v895 = vpop.f32.mrf.mxu0
    %v896 = vadd.f32 %v883, %v895
    %v897 = vpop.f32.mrf.mxu0
    %898 = vdwg.mxu0
    %899 = vmatpush.bf16.msra.mxu0 %v629
    %900 = vmatpush.bf16.msra.mxu0 %v627
    %901 = vmatpush.bf16.msra.mxu0 %v625
    %902 = vmatpush.bf16.msra.mxu0 %v623
    %903 = vmatpush.bf16.msra.mxu0 %v621
    %904 = vmatpush.bf16.msra.mxu0 %v619
    %905 = vmatpush.bf16.msra.mxu0 %v617
    %906 = vmatpush.bf16.msra.mxu0 %v615
    %907 = vmatmul.bf16.gmra.mxu0 %v283
    %v908 = vpop.f32.mrf.mxu0
    %v909 = vadd.f32 %v896, %v908
    %v910 = vpop.f32.mrf.mxu0
    %911 = vdwg.mxu0
    %912 = vmatpush.bf16.msra.mxu0 %v645
    %913 = vmatpush.bf16.msra.mxu0 %v643
    %914 = vmatpush.bf16.msra.mxu0 %v641
    %915 = vmatpush.bf16.msra.mxu0 %v639
    %916 = vmatpush.bf16.msra.mxu0 %v637
    %917 = vmatpush.bf16.msra.mxu0 %v635
    %918 = vmatpush.bf16.msra.mxu0 %v633
    %919 = vmatpush.bf16.msra.mxu0 %v631
    %920 = vmatmul.bf16.gmra.mxu0 %v284
    %v921 = vpop.f32.mrf.mxu0
    %v922 = vadd.f32 %v909, %v921
    %v923 = vpop.f32.mrf.mxu0
    %924 = vdwg.mxu0
    %925 = vmatpush.bf16.msra.mxu0 %v661
    %926 = vmatpush.bf16.msra.mxu0 %v659
    %927 = vmatpush.bf16.msra.mxu0 %v657
    %928 = vmatpush.bf16.msra.mxu0 %v655
    %929 = vmatpush.bf16.msra.mxu0 %v653
    %930 = vmatpush.bf16.msra.mxu0 %v651
    %931 = vmatpush.bf16.msra.mxu0 %v649
    %932 = vmatpush.bf16.msra.mxu0 %v647
    %933 = vmatmul.bf16.gmra.mxu0 %v285
    %v934 = vpop.f32.mrf.mxu0
    %v935 = vadd.f32 %v922, %v934
    %v936 = vpop.f32.mrf.mxu0
    %937 = vdwg.mxu0
    %938 = vmatpush.bf16.msra.mxu0 %v677
    %939 = vmatpush.bf16.msra.mxu0 %v675
    %940 = vmatpush.bf16.msra.mxu0 %v673
    %941 = vmatpush.bf16.msra.mxu0 %v671
    %942 = vmatpush.bf16.msra.mxu0 %v669
    %943 = vmatpush.bf16.msra.mxu0 %v667
    %944 = vmatpush.bf16.msra.mxu0 %v665
    %945 = vmatpush.bf16.msra.mxu0 %v663
    %946 = vmatmul.bf16.gmra.mxu0 %v286
    %v947 = vpop.f32.mrf.mxu0
    %v948 = vadd.f32 %v935, %v947
    %v949 = vpop.f32.mrf.mxu0
    %950 = vdwg.mxu0
    %951 = vmatpush.bf16.msra.mxu0 0
    %952 = vmatpush.bf16.msra.mxu0 0
    %953 = vmatpush.bf16.msra.mxu0 0
    %954 = vmatpush.bf16.msra.mxu0 0
    %955 = vmatpush.bf16.msra.mxu0 0
    %956 = vmatpush.bf16.msra.mxu0 0
    %957 = vmatpush.bf16.msra.mxu0 0
    %958 = vmatpush.bf16.msra.mxu0 %v679
    %959 = vmatmul.bf16.gmra.mxu0 %v780
    %v960 = vpop.f32.mrf.mxu0
    %v961 = vadd.f32 %v948, %v960
    %v962 = vpop.f32.mrf.mxu0
    %963 = vdwg.mxu0
    %v964 = vpack.c.bf16 %v870, %v870
    %v965 = vpack.c.bf16 %v961, %v961
    %v1030 = vunpack.c.l.b16 %v178
    %v1031 = vunpack.c.h.b16 %v178
    %v1032 = vunpack.c.l.b16 %v179
    %v1033 = vunpack.c.h.b16 %v179
    %v1034 = vunpack.c.l.b16 %v180
    %v1035 = vunpack.c.h.b16 %v180
    %v1036 = vunpack.c.l.b16 %v181
    %v1037 = vunpack.c.h.b16 %v181
    %v1038 = vunpack.c.l.b16 %v182
    %v1039 = vunpack.c.h.b16 %v182
    %v1040 = vunpack.c.l.b16 %v183
    %v1041 = vunpack.c.h.b16 %v183
    %v1042 = vunpack.c.l.b16 %v184
    %v1043 = vunpack.c.h.b16 %v184
    %v1044 = vunpack.c.l.b16 %v185
    %v1045 = vunpack.c.h.b16 %v185
    %v1046 = vunpack.c.l.b16 %v186
    %v1047 = vunpack.c.h.b16 %v186
    %v1048 = vunpack.c.l.b16 %v187
    %v1049 = vunpack.c.h.b16 %v187
    %v1050 = vunpack.c.l.b16 %v188
    %v1051 = vunpack.c.h.b16 %v188
    %v1052 = vunpack.c.l.b16 %v189
    %v1053 = vunpack.c.h.b16 %v189
    %v1054 = vunpack.c.l.b16 %v190
    %v1055 = vunpack.c.h.b16 %v190
    %v1056 = vunpack.c.l.b16 %v191
    %v1057 = vunpack.c.h.b16 %v191
    %v1058 = vunpack.c.l.b16 %v192
    %v1059 = vunpack.c.h.b16 %v192
    %v1060 = vunpack.c.l.b16 %v193
    %v1061 = vunpack.c.h.b16 %v193
    %v1062 = vunpack.c.l.b16 %v194
    %v1063 = vunpack.c.h.b16 %v194
    %v1064 = vunpack.c.l.b16 %v195
    %v1065 = vunpack.c.h.b16 %v195
    %v1066 = vunpack.c.l.b16 %v196
    %v1067 = vunpack.c.h.b16 %v196
    %v1068 = vunpack.c.l.b16 %v197
    %v1069 = vunpack.c.h.b16 %v197
    %v1070 = vunpack.c.l.b16 %v198
    %v1071 = vunpack.c.h.b16 %v198
    %v1072 = vunpack.c.l.b16 %v199
    %v1073 = vunpack.c.h.b16 %v199
    %v1074 = vunpack.c.l.b16 %v200
    %v1075 = vunpack.c.h.b16 %v200
    %v1076 = vunpack.c.l.b16 %v201
    %v1077 = vunpack.c.h.b16 %v201
    %v1078 = vunpack.c.l.b16 %v202
    %v1079 = vunpack.c.h.b16 %v202
    %v1080 = vunpack.c.l.b16 %v203
    %v1081 = vunpack.c.h.b16 %v203
    %v1082 = vunpack.c.l.b16 %v204
    %v1083 = vunpack.c.h.b16 %v204
    %v1084 = vunpack.c.l.b16 %v205
    %v1085 = vunpack.c.h.b16 %v205
    %v1086 = vunpack.c.l.b16 %v206
    %v1087 = vunpack.c.h.b16 %v206
    %v1088 = vunpack.c.l.b16 %v207
    %v1089 = vunpack.c.h.b16 %v207
    %v1090 = vunpack.c.l.b16 %v208
    %v1091 = vunpack.c.h.b16 %v208
    %v1092 = vunpack.c.l.b16 %v209
    %v1093 = vunpack.c.h.b16 %v209
    %v1094 = vunpack.c.l.b16 %v210
    %v1095 = vunpack.c.h.b16 %v210
    %v1096 = vunpack.c.l.b16 %v211
    %v1097 = vunpack.c.h.b16 %v211
    %v1098 = vunpack.c.l.b16 %v212
    %v1099 = vunpack.c.h.b16 %v212
    %v1100 = vunpack.c.l.b16 %v213
    %v1101 = vunpack.c.h.b16 %v213
    %v1102 = vunpack.c.l.b16 %v214
    %v1103 = vunpack.c.h.b16 %v214
    %v1104 = vunpack.c.l.b16 %v215
    %v1105 = vunpack.c.h.b16 %v215
    %v1106 = vunpack.c.l.b16 %v216
    %v1107 = vunpack.c.h.b16 %v216
    %v1108 = vunpack.c.l.b16 %v217
    %v1109 = vunpack.c.h.b16 %v217
    %v1110 = vunpack.c.l.b16 %v218
    %v1111 = vunpack.c.h.b16 %v218
    %v1112 = vunpack.c.l.b16 %v219
    %v1113 = vunpack.c.h.b16 %v219
    %v1114 = vunpack.c.l.b16 %v220
    %v1115 = vunpack.c.h.b16 %v220
    %v1116 = vunpack.c.l.b16 %v221
    %v1117 = vunpack.c.h.b16 %v221
    %v1118 = vunpack.c.l.b16 %v222
    %v1119 = vunpack.c.h.b16 %v222
    %v1120 = vunpack.c.l.b16 %v223
    %v1121 = vunpack.c.h.b16 %v223
    %v1122 = vunpack.c.l.b16 %v224
    %v1123 = vunpack.c.h.b16 %v224
    %v1124 = vunpack.c.l.b16 %v225
    %v1125 = vunpack.c.h.b16 %v225
    %v1126 = vunpack.c.l.b16 %v226
    %v1127 = vunpack.c.h.b16 %v226
    %v1128 = vunpack.c.l.b16 %v227
    %v1129 = vunpack.c.h.b16 %v227
    %v1130 = vunpack.c.l.b16 %v228
    %v1131 = vunpack.c.h.b16 %v228
    %v1132 = vunpack.c.l.b16 %v229
    %v1133 = vunpack.c.h.b16 %v229
    %v1134 = vunpack.c.l.b16 %v230
    %v1135 = vunpack.c.h.b16 %v230
    %v1136 = vunpack.c.l.b16 %v231
    %v1137 = vunpack.c.h.b16 %v231
    %v1138 = vunpack.c.l.b16 %v232
    %v1139 = vunpack.c.h.b16 %v232
    %v1140 = vunpack.c.l.b16 %v233
    %v1141 = vunpack.c.h.b16 %v233
    %v1142 = vunpack.c.l.b16 %v234
    %v1143 = vunpack.c.h.b16 %v234
    %v1144 = vunpack.c.l.b16 %v235
    %v1145 = vunpack.c.h.b16 %v235
    %v1146 = vunpack.c.l.b16 %v236
    %v1147 = vunpack.c.h.b16 %v236
    %v1148 = vunpack.c.l.b16 %v237
    %v1149 = vunpack.c.h.b16 %v237
    %v1150 = vunpack.c.l.b16 %v238
    %v1151 = vunpack.c.h.b16 %v238
    %v1152 = vunpack.c.l.b16 %v239
    %v1153 = vunpack.c.h.b16 %v239
    %v1154 = vunpack.c.l.b16 %v240
    %v1155 = vunpack.c.h.b16 %v240
    %v1156 = vunpack.c.l.b16 %v241
    %v1157 = vunpack.c.h.b16 %v241
    %v1158 = vpack.c.b16 %v1034, %v1030
    %v1159 = vpack.c.b16 %v1035, %v1031
    %v1160 = vpack.c.b16 %v1036, %v1032
    %v1161 = vpack.c.b16 %v1037, %v1033
    %v1162 = vpack.c.b16 %v1042, %v1038
    %v1163 = vpack.c.b16 %v1043, %v1039
    %v1164 = vpack.c.b16 %v1044, %v1040
    %v1165 = vpack.c.b16 %v1045, %v1041
    %v1166 = vpack.c.b16 %v1050, %v1046
    %v1167 = vpack.c.b16 %v1051, %v1047
    %v1168 = vpack.c.b16 %v1052, %v1048
    %v1169 = vpack.c.b16 %v1053, %v1049
    %v1170 = vpack.c.b16 %v1058, %v1054
    %v1171 = vpack.c.b16 %v1059, %v1055
    %v1172 = vpack.c.b16 %v1060, %v1056
    %v1173 = vpack.c.b16 %v1061, %v1057
    %v1174 = vpack.c.b16 %v1066, %v1062
    %v1175 = vpack.c.b16 %v1067, %v1063
    %v1176 = vpack.c.b16 %v1068, %v1064
    %v1177 = vpack.c.b16 %v1069, %v1065
    %v1178 = vpack.c.b16 %v1074, %v1070
    %v1179 = vpack.c.b16 %v1075, %v1071
    %v1180 = vpack.c.b16 %v1076, %v1072
    %v1181 = vpack.c.b16 %v1077, %v1073
    %v1182 = vpack.c.b16 %v1082, %v1078
    %v1183 = vpack.c.b16 %v1083, %v1079
    %v1184 = vpack.c.b16 %v1084, %v1080
    %v1185 = vpack.c.b16 %v1085, %v1081
    %v1186 = vpack.c.b16 %v1090, %v1086
    %v1187 = vpack.c.b16 %v1091, %v1087
    %v1188 = vpack.c.b16 %v1092, %v1088
    %v1189 = vpack.c.b16 %v1093, %v1089
    %v1190 = vpack.c.b16 %v1098, %v1094
    %v1191 = vpack.c.b16 %v1099, %v1095
    %v1192 = vpack.c.b16 %v1100, %v1096
    %v1193 = vpack.c.b16 %v1101, %v1097
    %v1194 = vpack.c.b16 %v1106, %v1102
    %v1195 = vpack.c.b16 %v1107, %v1103
    %v1196 = vpack.c.b16 %v1108, %v1104
    %v1197 = vpack.c.b16 %v1109, %v1105
    %v1198 = vpack.c.b16 %v1114, %v1110
    %v1199 = vpack.c.b16 %v1115, %v1111
    %v1200 = vpack.c.b16 %v1116, %v1112
    %v1201 = vpack.c.b16 %v1117, %v1113
    %v1202 = vpack.c.b16 %v1122, %v1118
    %v1203 = vpack.c.b16 %v1123, %v1119
    %v1204 = vpack.c.b16 %v1124, %v1120
    %v1205 = vpack.c.b16 %v1125, %v1121
    %v1206 = vpack.c.b16 %v1130, %v1126
    %v1207 = vpack.c.b16 %v1131, %v1127
    %v1208 = vpack.c.b16 %v1132, %v1128
    %v1209 = vpack.c.b16 %v1133, %v1129
    %v1210 = vpack.c.b16 %v1138, %v1134
    %v1211 = vpack.c.b16 %v1139, %v1135
    %v1212 = vpack.c.b16 %v1140, %v1136
    %v1213 = vpack.c.b16 %v1141, %v1137
    %v1214 = vpack.c.b16 %v1146, %v1142
    %v1215 = vpack.c.b16 %v1147, %v1143
    %v1216 = vpack.c.b16 %v1148, %v1144
    %v1217 = vpack.c.b16 %v1149, %v1145
    %v1218 = vpack.c.b16 %v1154, %v1150
    %v1219 = vpack.c.b16 %v1155, %v1151
    %v1220 = vpack.c.b16 %v1156, %v1152
    %v1221 = vpack.c.b16 %v1157, %v1153
    %1286 = vmatpush.bf16.msra.mxu0 %v1186
    %1287 = vmatpush.bf16.msra.mxu0 %v1182
    %1288 = vmatpush.bf16.msra.mxu0 %v1178
    %1289 = vmatpush.bf16.msra.mxu0 %v1174
    %1290 = vmatpush.bf16.msra.mxu0 %v1170
    %1291 = vmatpush.bf16.msra.mxu0 %v1166
    %1292 = vmatpush.bf16.msra.mxu0 %v1162
    %1293 = vmatpush.bf16.msra.mxu0 %v1158
    %1294 = vmatmul.bf16.gmra.mxu0 %v964
    %v1295 = vpop.f32.mrf.mxu0
    %v1296 = vadd.f32 0.0, %v1295
    %v1297 = vpop.f32.mrf.mxu0
    %1298 = vdwg.mxu0
    %1299 = vmatpush.bf16.msra.mxu0 %v1218
    %1300 = vmatpush.bf16.msra.mxu0 %v1214
    %1301 = vmatpush.bf16.msra.mxu0 %v1210
    %1302 = vmatpush.bf16.msra.mxu0 %v1206
    %1303 = vmatpush.bf16.msra.mxu0 %v1202
    %1304 = vmatpush.bf16.msra.mxu0 %v1198
    %1305 = vmatpush.bf16.msra.mxu0 %v1194
    %1306 = vmatpush.bf16.msra.mxu0 %v1190
    %1307 = vmatmul.bf16.gmra.mxu0 %v965
    %v1308 = vpop.f32.mrf.mxu0
    %v1309 = vadd.f32 %v1296, %v1308
    %v1310 = vpop.f32.mrf.mxu0
    %1311 = vdwg.mxu0
    %1312 = vmatpush.bf16.msra.mxu0 %v1187
    %1313 = vmatpush.bf16.msra.mxu0 %v1183
    %1314 = vmatpush.bf16.msra.mxu0 %v1179
    %1315 = vmatpush.bf16.msra.mxu0 %v1175
    %1316 = vmatpush.bf16.msra.mxu0 %v1171
    %1317 = vmatpush.bf16.msra.mxu0 %v1167
    %1318 = vmatpush.bf16.msra.mxu0 %v1163
    %1319 = vmatpush.bf16.msra.mxu0 %v1159
    %1320 = vmatmul.bf16.gmra.mxu0 %v964
    %v1321 = vpop.f32.mrf.mxu0
    %v1322 = vadd.f32 0.0, %v1321
    %v1323 = vpop.f32.mrf.mxu0
    %1324 = vdwg.mxu0
    %1325 = vmatpush.bf16.msra.mxu0 %v1219
    %1326 = vmatpush.bf16.msra.mxu0 %v1215
    %1327 = vmatpush.bf16.msra.mxu0 %v1211
    %1328 = vmatpush.bf16.msra.mxu0 %v1207
    %1329 = vmatpush.bf16.msra.mxu0 %v1203
    %1330 = vmatpush.bf16.msra.mxu0 %v1199
    %1331 = vmatpush.bf16.msra.mxu0 %v1195
    %1332 = vmatpush.bf16.msra.mxu0 %v1191
    %1333 = vmatmul.bf16.gmra.mxu0 %v965
    %v1334 = vpop.f32.mrf.mxu0
    %v1335 = vadd.f32 %v1322, %v1334
    %v1336 = vpop.f32.mrf.mxu0
    %1337 = vdwg.mxu0
    %1338 = vmatpush.bf16.msra.mxu0 %v1188
    %1339 = vmatpush.bf16.msra.mxu0 %v1184
    %1340 = vmatpush.bf16.msra.mxu0 %v1180
    %1341 = vmatpush.bf16.msra.mxu0 %v1176
    %1342 = vmatpush.bf16.msra.mxu0 %v1172
    %1343 = vmatpush.bf16.msra.mxu0 %v1168
    %1344 = vmatpush.bf16.msra.mxu0 %v1164
    %1345 = vmatpush.bf16.msra.mxu0 %v1160
    %1346 = vmatmul.bf16.gmra.mxu0 %v964
    %v1347 = vpop.f32.mrf.mxu0
    %v1348 = vadd.f32 0.0, %v1347
    %v1349 = vpop.f32.mrf.mxu0
    %1350 = vdwg.mxu0
    %1351 = vmatpush.bf16.msra.mxu0 %v1220
    %1352 = vmatpush.bf16.msra.mxu0 %v1216
    %1353 = vmatpush.bf16.msra.mxu0 %v1212
    %1354 = vmatpush.bf16.msra.mxu0 %v1208
    %1355 = vmatpush.bf16.msra.mxu0 %v1204
    %1356 = vmatpush.bf16.msra.mxu0 %v1200
    %1357 = vmatpush.bf16.msra.mxu0 %v1196
    %1358 = vmatpush.bf16.msra.mxu0 %v1192
    %1359 = vmatmul.bf16.gmra.mxu0 %v965
    %v1360 = vpop.f32.mrf.mxu0
    %v1361 = vadd.f32 %v1348, %v1360
    %v1362 = vpop.f32.mrf.mxu0
    %1363 = vdwg.mxu0
    %1364 = vmatpush.bf16.msra.mxu0 %v1189
    %1365 = vmatpush.bf16.msra.mxu0 %v1185
    %1366 = vmatpush.bf16.msra.mxu0 %v1181
    %1367 = vmatpush.bf16.msra.mxu0 %v1177
    %1368 = vmatpush.bf16.msra.mxu0 %v1173
    %1369 = vmatpush.bf16.msra.mxu0 %v1169
    %1370 = vmatpush.bf16.msra.mxu0 %v1165
    %1371 = vmatpush.bf16.msra.mxu0 %v1161
    %1372 = vmatmul.bf16.gmra.mxu0 %v964
    %v1373 = vpop.f32.mrf.mxu0
    %v1374 = vadd.f32 0.0, %v1373
    %v1375 = vpop.f32.mrf.mxu0
    %1376 = vdwg.mxu0
    %1377 = vmatpush.bf16.msra.mxu0 %v1221
    %1378 = vmatpush.bf16.msra.mxu0 %v1217
    %1379 = vmatpush.bf16.msra.mxu0 %v1213
    %1380 = vmatpush.bf16.msra.mxu0 %v1209
    %1381 = vmatpush.bf16.msra.mxu0 %v1205
    %1382 = vmatpush.bf16.msra.mxu0 %v1201
    %1383 = vmatpush.bf16.msra.mxu0 %v1197
    %1384 = vmatpush.bf16.msra.mxu0 %v1193
    %1385 = vmatmul.bf16.gmra.mxu0 %v965
    %v1386 = vpop.f32.mrf.mxu0
    %v1387 = vadd.f32 %v1374, %v1386
    %v1388 = vpop.f32.mrf.mxu0
    %1389 = vdwg.mxu0
    %v1390 = vmul.f32 %v1309, %v870
    %v1391 = vmul.f32 %v1335, %v961
    %v1392 = vadd.f32 %v1390, %v1361
    %v1393 = vadd.f32 %v1391, %v1387
    %v1394 = vpack.c.bf16 %v1392, %v1392
    %v1395 = vpack.c.bf16 %v1393, %v1393
    %1396 = vmatpush.bf16.msra.mxu0 %v1186
    %1397 = vmatpush.bf16.msra.mxu0 %v1182
    %1398 = vmatpush.bf16.msra.mxu0 %v1178
    %1399 = vmatpush.bf16.msra.mxu0 %v1174
    %1400 = vmatpush.bf16.msra.mxu0 %v1170
    %1401 = vmatpush.bf16.msra.mxu0 %v1166
    %1402 = vmatpush.bf16.msra.mxu0 %v1162
    %1403 = vmatpush.bf16.msra.mxu0 %v1158
    %1404 = vmatmul.bf16.gmra.mxu0 %v1394
    %v1405 = vpop.f32.mrf.mxu0
    %v1406 = vadd.f32 0.0, %v1405
    %v1407 = vpop.f32.mrf.mxu0
    %1408 = vdwg.mxu0
    %1409 = vmatpush.bf16.msra.mxu0 %v1218
    %1410 = vmatpush.bf16.msra.mxu0 %v1214
    %1411 = vmatpush.bf16.msra.mxu0 %v1210
    %1412 = vmatpush.bf16.msra.mxu0 %v1206
    %1413 = vmatpush.bf16.msra.mxu0 %v1202
    %1414 = vmatpush.bf16.msra.mxu0 %v1198
    %1415 = vmatpush.bf16.msra.mxu0 %v1194
    %1416 = vmatpush.bf16.msra.mxu0 %v1190
    %1417 = vmatmul.bf16.gmra.mxu0 %v1395
    %v1418 = vpop.f32.mrf.mxu0
    %v1419 = vadd.f32 %v1406, %v1418
    %v1420 = vpop.f32.mrf.mxu0
    %1421 = vdwg.mxu0
    %1422 = vmatpush.bf16.msra.mxu0 %v1187
    %1423 = vmatpush.bf16.msra.mxu0 %v1183
    %1424 = vmatpush.bf16.msra.mxu0 %v1179
    %1425 = vmatpush.bf16.msra.mxu0 %v1175
    %1426 = vmatpush.bf16.msra.mxu0 %v1171
    %1427 = vmatpush.bf16.msra.mxu0 %v1167
    %1428 = vmatpush.bf16.msra.mxu0 %v1163
    %1429 = vmatpush.bf16.msra.mxu0 %v1159
    %1430 = vmatmul.bf16.gmra.mxu0 %v1394
    %v1431 = vpop.f32.mrf.mxu0
    %v1432 = vadd.f32 0.0, %v1431
    %v1433 = vpop.f32.mrf.mxu0
    %1434 = vdwg.mxu0
    %1435 = vmatpush.bf16.msra.mxu0 %v1219
    %1436 = vmatpush.bf16.msra.mxu0 %v1215
    %1437 = vmatpush.bf16.msra.mxu0 %v1211
    %1438 = vmatpush.bf16.msra.mxu0 %v1207
    %1439 = vmatpush.bf16.msra.mxu0 %v1203
    %1440 = vmatpush.bf16.msra.mxu0 %v1199
    %1441 = vmatpush.bf16.msra.mxu0 %v1195
    %1442 = vmatpush.bf16.msra.mxu0 %v1191
    %1443 = vmatmul.bf16.gmra.mxu0 %v1395
    %v1444 = vpop.f32.mrf.mxu0
    %v1445 = vadd.f32 %v1432, %v1444
    %v1446 = vpop.f32.mrf.mxu0
    %1447 = vdwg.mxu0
    %1448 = vmatpush.bf16.msra.mxu0 %v1188
    %1449 = vmatpush.bf16.msra.mxu0 %v1184
    %1450 = vmatpush.bf16.msra.mxu0 %v1180
    %1451 = vmatpush.bf16.msra.mxu0 %v1176
    %1452 = vmatpush.bf16.msra.mxu0 %v1172
    %1453 = vmatpush.bf16.msra.mxu0 %v1168
    %1454 = vmatpush.bf16.msra.mxu0 %v1164
    %1455 = vmatpush.bf16.msra.mxu0 %v1160
    %1456 = vmatmul.bf16.gmra.mxu0 %v1394
    %v1457 = vpop.f32.mrf.mxu0
    %v1458 = vadd.f32 0.0, %v1457
    %v1459 = vpop.f32.mrf.mxu0
    %1460 = vdwg.mxu0
    %1461 = vmatpush.bf16.msra.mxu0 %v1220
    %1462 = vmatpush.bf16.msra.mxu0 %v1216
    %1463 = vmatpush.bf16.msra.mxu0 %v1212
    %1464 = vmatpush.bf16.msra.mxu0 %v1208
    %1465 = vmatpush.bf16.msra.mxu0 %v1204
    %1466 = vmatpush.bf16.msra.mxu0 %v1200
    %1467 = vmatpush.bf16.msra.mxu0 %v1196
    %1468 = vmatpush.bf16.msra.mxu0 %v1192
    %1469 = vmatmul.bf16.gmra.mxu0 %v1395
    %v1470 = vpop.f32.mrf.mxu0
    %v1471 = vadd.f32 %v1458, %v1470
    %v1472 = vpop.f32.mrf.mxu0
    %1473 = vdwg.mxu0
    %1474 = vmatpush.bf16.msra.mxu0 %v1189
    %1475 = vmatpush.bf16.msra.mxu0 %v1185
    %1476 = vmatpush.bf16.msra.mxu0 %v1181
    %1477 = vmatpush.bf16.msra.mxu0 %v1177
    %1478 = vmatpush.bf16.msra.mxu0 %v1173
    %1479 = vmatpush.bf16.msra.mxu0 %v1169
    %1480 = vmatpush.bf16.msra.mxu0 %v1165
    %1481 = vmatpush.bf16.msra.mxu0 %v1161
    %1482 = vmatmul.bf16.gmra.mxu0 %v1394
    %v1483 = vpop.f32.mrf.mxu0
    %v1484 = vadd.f32 0.0, %v1483
    %v1485 = vpop.f32.mrf.mxu0
    %1486 = vdwg.mxu0
    %1487 = vmatpush.bf16.msra.mxu0 %v1221
    %1488 = vmatpush.bf16.msra.mxu0 %v1217
    %1489 = vmatpush.bf16.msra.mxu0 %v1213
    %1490 = vmatpush.bf16.msra.mxu0 %v1209
    %1491 = vmatpush.bf16.msra.mxu0 %v1205
    %1492 = vmatpush.bf16.msra.mxu0 %v1201
    %1493 = vmatpush.bf16.msra.mxu0 %v1197
    %1494 = vmatpush.bf16.msra.mxu0 %v1193
    %1495 = vmatmul.bf16.gmra.mxu0 %v1395
    %v1496 = vpop.f32.mrf.mxu0
    %v1497 = vadd.f32 %v1484, %v1496
    %v1498 = vpop.f32.mrf.mxu0
    %1499 = vdwg.mxu0
    %v1500 = vmul.f32 %v1419, %v870
    %v1501 = vmul.f32 %v1445, %v961
    %v1502 = vadd.f32 %v1500, %v1471
    %v1503 = vadd.f32 %v1501, %v1497
    %v1504 = vpack.c.bf16 %v1502, %v1502
    %v1505 = vpack.c.bf16 %v1503, %v1503
    %1506 = vmatpush.bf16.msra.mxu0 %v1186
    %1507 = vmatpush.bf16.msra.mxu0 %v1182
    %1508 = vmatpush.bf16.msra.mxu0 %v1178
    %1509 = vmatpush.bf16.msra.mxu0 %v1174
    %1510 = vmatpush.bf16.msra.mxu0 %v1170
    %1511 = vmatpush.bf16.msra.mxu0 %v1166
    %1512 = vmatpush.bf16.msra.mxu0 %v1162
    %1513 = vmatpush.bf16.msra.mxu0 %v1158
    %1514 = vmatmul.bf16.gmra.mxu0 %v1504
    %v1515 = vpop.f32.mrf.mxu0
    %v1516 = vadd.f32 0.0, %v1515
    %v1517 = vpop.f32.mrf.mxu0
    %1518 = vdwg.mxu0
    %1519 = vmatpush.bf16.msra.mxu0 %v1218
    %1520 = vmatpush.bf16.msra.mxu0 %v1214
    %1521 = vmatpush.bf16.msra.mxu0 %v1210
    %1522 = vmatpush.bf16.msra.mxu0 %v1206
    %1523 = vmatpush.bf16.msra.mxu0 %v1202
    %1524 = vmatpush.bf16.msra.mxu0 %v1198
    %1525 = vmatpush.bf16.msra.mxu0 %v1194
    %1526 = vmatpush.bf16.msra.mxu0 %v1190
    %1527 = vmatmul.bf16.gmra.mxu0 %v1505
    %v1528 = vpop.f32.mrf.mxu0
    %v1529 = vadd.f32 %v1516, %v1528
    %v1530 = vpop.f32.mrf.mxu0
    %1531 = vdwg.mxu0
    %1532 = vmatpush.bf16.msra.mxu0 %v1187
    %1533 = vmatpush.bf16.msra.mxu0 %v1183
    %1534 = vmatpush.bf16.msra.mxu0 %v1179
    %1535 = vmatpush.bf16.msra.mxu0 %v1175
    %1536 = vmatpush.bf16.msra.mxu0 %v1171
    %1537 = vmatpush.bf16.msra.mxu0 %v1167
    %1538 = vmatpush.bf16.msra.mxu0 %v1163
    %1539 = vmatpush.bf16.msra.mxu0 %v1159
    %1540 = vmatmul.bf16.gmra.mxu0 %v1504
    %v1541 = vpop.f32.mrf.mxu0
    %v1542 = vadd.f32 0.0, %v1541
    %v1543 = vpop.f32.mrf.mxu0
    %1544 = vdwg.mxu0
    %1545 = vmatpush.bf16.msra.mxu0 %v1219
    %1546 = vmatpush.bf16.msra.mxu0 %v1215
    %1547 = vmatpush.bf16.msra.mxu0 %v1211
    %1548 = vmatpush.bf16.msra.mxu0 %v1207
    %1549 = vmatpush.bf16.msra.mxu0 %v1203
    %1550 = vmatpush.bf16.msra.mxu0 %v1199
    %1551 = vmatpush.bf16.msra.mxu0 %v1195
    %1552 = vmatpush.bf16.msra.mxu0 %v1191
    %1553 = vmatmul.bf16.gmra.mxu0 %v1505
    %v1554 = vpop.f32.mrf.mxu0
    %v1555 = vadd.f32 %v1542, %v1554
    %v1556 = vpop.f32.mrf.mxu0
    %1557 = vdwg.mxu0
    %1558 = vmatpush.bf16.msra.mxu0 %v1188
    %1559 = vmatpush.bf16.msra.mxu0 %v1184
    %1560 = vmatpush.bf16.msra.mxu0 %v1180
    %1561 = vmatpush.bf16.msra.mxu0 %v1176
    %1562 = vmatpush.bf16.msra.mxu0 %v1172
    %1563 = vmatpush.bf16.msra.mxu0 %v1168
    %1564 = vmatpush.bf16.msra.mxu0 %v1164
    %1565 = vmatpush.bf16.msra.mxu0 %v1160
    %1566 = vmatmul.bf16.gmra.mxu0 %v1504
    %v1567 = vpop.f32.mrf.mxu0
    %v1568 = vadd.f32 0.0, %v1567
    %v1569 = vpop.f32.mrf.mxu0
    %1570 = vdwg.mxu0
    %1571 = vmatpush.bf16.msra.mxu0 %v1220
    %1572 = vmatpush.bf16.msra.mxu0 %v1216
    %1573 = vmatpush.bf16.msra.mxu0 %v1212
    %1574 = vmatpush.bf16.msra.mxu0 %v1208
    %1575 = vmatpush.bf16.msra.mxu0 %v1204
    %1576 = vmatpush.bf16.msra.mxu0 %v1200
    %1577 = vmatpush.bf16.msra.mxu0 %v1196
    %1578 = vmatpush.bf16.msra.mxu0 %v1192
    %1579 = vmatmul.bf16.gmra.mxu0 %v1505
    %v1580 = vpop.f32.mrf.mxu0
    %v1581 = vadd.f32 %v1568, %v1580
    %v1582 = vpop.f32.mrf.mxu0
    %1583 = vdwg.mxu0
    %1584 = vmatpush.bf16.msra.mxu0 %v1189
    %1585 = vmatpush.bf16.msra.mxu0 %v1185
    %1586 = vmatpush.bf16.msra.mxu0 %v1181
    %1587 = vmatpush.bf16.msra.mxu0 %v1177
    %1588 = vmatpush.bf16.msra.mxu0 %v1173
    %1589 = vmatpush.bf16.msra.mxu0 %v1169
    %1590 = vmatpush.bf16.msra.mxu0 %v1165
    %1591 = vmatpush.bf16.msra.mxu0 %v1161
    %1592 = vmatmul.bf16.gmra.mxu0 %v1504
    %v1593 = vpop.f32.mrf.mxu0
    %v1594 = vadd.f32 0.0, %v1593
    %v1595 = vpop.f32.mrf.mxu0
    %1596 = vdwg.mxu0
    %1597 = vmatpush.bf16.msra.mxu0 %v1221
    %1598 = vmatpush.bf16.msra.mxu0 %v1217
    %1599 = vmatpush.bf16.msra.mxu0 %v1213
    %1600 = vmatpush.bf16.msra.mxu0 %v1209
    %1601 = vmatpush.bf16.msra.mxu0 %v1205
    %1602 = vmatpush.bf16.msra.mxu0 %v1201
    %1603 = vmatpush.bf16.msra.mxu0 %v1197
    %1604 = vmatpush.bf16.msra.mxu0 %v1193
    %1605 = vmatmul.bf16.gmra.mxu0 %v1505
    %v1606 = vpop.f32.mrf.mxu0
    %v1607 = vadd.f32 %v1594, %v1606
    %v1608 = vpop.f32.mrf.mxu0
    %1609 = vdwg.mxu0
    %v1610 = vmul.f32 %v1529, %v870
    %v1611 = vmul.f32 %v1555, %v961
    %v1612 = vadd.f32 %v1610, %v1581
    %v1613 = vadd.f32 %v1611, %v1607
    %v1614 = vpack.c.bf16 %v1612, %v1612
    %v1615 = vpack.c.bf16 %v1613, %v1613
    %1616 = vmatpush.bf16.msra.mxu0 %v1186
    %1617 = vmatpush.bf16.msra.mxu0 %v1182
    %1618 = vmatpush.bf16.msra.mxu0 %v1178
    %1619 = vmatpush.bf16.msra.mxu0 %v1174
    %1620 = vmatpush.bf16.msra.mxu0 %v1170
    %1621 = vmatpush.bf16.msra.mxu0 %v1166
    %1622 = vmatpush.bf16.msra.mxu0 %v1162
    %1623 = vmatpush.bf16.msra.mxu0 %v1158
    %1624 = vmatmul.bf16.gmra.mxu0 %v1614
    %v1625 = vpop.f32.mrf.mxu0
    %v1626 = vadd.f32 0.0, %v1625
    %v1627 = vpop.f32.mrf.mxu0
    %1628 = vdwg.mxu0
    %1629 = vmatpush.bf16.msra.mxu0 %v1218
    %1630 = vmatpush.bf16.msra.mxu0 %v1214
    %1631 = vmatpush.bf16.msra.mxu0 %v1210
    %1632 = vmatpush.bf16.msra.mxu0 %v1206
    %1633 = vmatpush.bf16.msra.mxu0 %v1202
    %1634 = vmatpush.bf16.msra.mxu0 %v1198
    %1635 = vmatpush.bf16.msra.mxu0 %v1194
    %1636 = vmatpush.bf16.msra.mxu0 %v1190
    %1637 = vmatmul.bf16.gmra.mxu0 %v1615
    %v1638 = vpop.f32.mrf.mxu0
    %v1639 = vadd.f32 %v1626, %v1638
    %v1640 = vpop.f32.mrf.mxu0
    %1641 = vdwg.mxu0
    %1642 = vmatpush.bf16.msra.mxu0 %v1187
    %1643 = vmatpush.bf16.msra.mxu0 %v1183
    %1644 = vmatpush.bf16.msra.mxu0 %v1179
    %1645 = vmatpush.bf16.msra.mxu0 %v1175
    %1646 = vmatpush.bf16.msra.mxu0 %v1171
    %1647 = vmatpush.bf16.msra.mxu0 %v1167
    %1648 = vmatpush.bf16.msra.mxu0 %v1163
    %1649 = vmatpush.bf16.msra.mxu0 %v1159
    %1650 = vmatmul.bf16.gmra.mxu0 %v1614
    %v1651 = vpop.f32.mrf.mxu0
    %v1652 = vadd.f32 0.0, %v1651
    %v1653 = vpop.f32.mrf.mxu0
    %1654 = vdwg.mxu0
    %1655 = vmatpush.bf16.msra.mxu0 %v1219
    %1656 = vmatpush.bf16.msra.mxu0 %v1215
    %1657 = vmatpush.bf16.msra.mxu0 %v1211
    %1658 = vmatpush.bf16.msra.mxu0 %v1207
    %1659 = vmatpush.bf16.msra.mxu0 %v1203
    %1660 = vmatpush.bf16.msra.mxu0 %v1199
    %1661 = vmatpush.bf16.msra.mxu0 %v1195
    %1662 = vmatpush.bf16.msra.mxu0 %v1191
    %1663 = vmatmul.bf16.gmra.mxu0 %v1615
    %v1664 = vpop.f32.mrf.mxu0
    %v1665 = vadd.f32 %v1652, %v1664
    %v1666 = vpop.f32.mrf.mxu0
    %1667 = vdwg.mxu0
    %1668 = vmatpush.bf16.msra.mxu0 %v1188
    %1669 = vmatpush.bf16.msra.mxu0 %v1184
    %1670 = vmatpush.bf16.msra.mxu0 %v1180
    %1671 = vmatpush.bf16.msra.mxu0 %v1176
    %1672 = vmatpush.bf16.msra.mxu0 %v1172
    %1673 = vmatpush.bf16.msra.mxu0 %v1168
    %1674 = vmatpush.bf16.msra.mxu0 %v1164
    %1675 = vmatpush.bf16.msra.mxu0 %v1160
    %1676 = vmatmul.bf16.gmra.mxu0 %v1614
    %v1677 = vpop.f32.mrf.mxu0
    %v1678 = vadd.f32 0.0, %v1677
    %v1679 = vpop.f32.mrf.mxu0
    %1680 = vdwg.mxu0
    %1681 = vmatpush.bf16.msra.mxu0 %v1220
    %1682 = vmatpush.bf16.msra.mxu0 %v1216
    %1683 = vmatpush.bf16.msra.mxu0 %v1212
    %1684 = vmatpush.bf16.msra.mxu0 %v1208
    %1685 = vmatpush.bf16.msra.mxu0 %v1204
    %1686 = vmatpush.bf16.msra.mxu0 %v1200
    %1687 = vmatpush.bf16.msra.mxu0 %v1196
    %1688 = vmatpush.bf16.msra.mxu0 %v1192
    %1689 = vmatmul.bf16.gmra.mxu0 %v1615
    %v1690 = vpop.f32.mrf.mxu0
    %v1691 = vadd.f32 %v1678, %v1690
    %v1692 = vpop.f32.mrf.mxu0
    %1693 = vdwg.mxu0
    %1694 = vmatpush.bf16.msra.mxu0 %v1189
    %1695 = vmatpush.bf16.msra.mxu0 %v1185
    %1696 = vmatpush.bf16.msra.mxu0 %v1181
    %1697 = vmatpush.bf16.msra.mxu0 %v1177
    %1698 = vmatpush.bf16.msra.mxu0 %v1173
    %1699 = vmatpush.bf16.msra.mxu0 %v1169
    %1700 = vmatpush.bf16.msra.mxu0 %v1165
    %1701 = vmatpush.bf16.msra.mxu0 %v1161
    %1702 = vmatmul.bf16.gmra.mxu0 %v1614
    %v1703 = vpop.f32.mrf.mxu0
    %v1704 = vadd.f32 0.0, %v1703
    %v1705 = vpop.f32.mrf.mxu0
    %1706 = vdwg.mxu0
    %1707 = vmatpush.bf16.msra.mxu0 %v1221
    %1708 = vmatpush.bf16.msra.mxu0 %v1217
    %1709 = vmatpush.bf16.msra.mxu0 %v1213
    %1710 = vmatpush.bf16.msra.mxu0 %v1209
    %1711 = vmatpush.bf16.msra.mxu0 %v1205
    %1712 = vmatpush.bf16.msra.mxu0 %v1201
    %1713 = vmatpush.bf16.msra.mxu0 %v1197
    %1714 = vmatpush.bf16.msra.mxu0 %v1193
    %1715 = vmatmul.bf16.gmra.mxu0 %v1615
    %v1716 = vpop.f32.mrf.mxu0
    %v1717 = vadd.f32 %v1704, %v1716
    %v1718 = vpop.f32.mrf.mxu0
    %1719 = vdwg.mxu0
    %v1720 = vmul.f32 %v1639, %v870
    %v1721 = vmul.f32 %v1665, %v961
    %v1722 = vadd.f32 %v1720, %v1691
    %v1723 = vadd.f32 %v1721, %v1717
    %v1724 = vpack.c.bf16 %v1722, %v1722
    %v1725 = vpack.c.bf16 %v1723, %v1723
    %v1758 = vunpack.c.l.b16 %v242
    %v1759 = vunpack.c.l.b16 %v243
    %v1760 = vunpack.c.l.b16 %v244
    %v1761 = vunpack.c.l.b16 %v245
    %v1762 = vunpack.c.l.b16 %v246
    %v1763 = vunpack.c.l.b16 %v247
    %v1764 = vunpack.c.l.b16 %v248
    %v1765 = vunpack.c.l.b16 %v249
    %v1766 = vunpack.c.l.b16 %v250
    %v1767 = vunpack.c.l.b16 %v251
    %v1768 = vunpack.c.l.b16 %v252
    %v1769 = vunpack.c.l.b16 %v253
    %v1770 = vunpack.c.l.b16 %v254
    %v1771 = vunpack.c.l.b16 %v255
    %v1772 = vunpack.c.l.b16 %v256
    %v1773 = vunpack.c.l.b16 %v257
    %v1774 = vunpack.c.l.b16 %v258
    %v1775 = vunpack.c.l.b16 %v259
    %v1776 = vunpack.c.l.b16 %v260
    %v1777 = vunpack.c.l.b16 %v261
    %v1778 = vunpack.c.l.b16 %v262
    %v1779 = vunpack.c.l.b16 %v263
    %v1780 = vunpack.c.l.b16 %v264
    %v1781 = vunpack.c.l.b16 %v265
    %v1782 = vunpack.c.l.b16 %v266
    %v1783 = vunpack.c.l.b16 %v267
    %v1784 = vunpack.c.l.b16 %v268
    %v1785 = vunpack.c.l.b16 %v269
    %v1786 = vunpack.c.l.b16 %v270
    %v1787 = vunpack.c.l.b16 %v271
    %v1788 = vunpack.c.l.b16 %v272
    %v1789 = vunpack.c.l.b16 %v273
    %v1790 = vpack.c.b16 %v1759, %v1758
    %v1791 = vpack.c.b16 %v1761, %v1760
    %v1792 = vpack.c.b16 %v1763, %v1762
    %v1793 = vpack.c.b16 %v1765, %v1764
    %v1794 = vpack.c.b16 %v1767, %v1766
    %v1795 = vpack.c.b16 %v1769, %v1768
    %v1796 = vpack.c.b16 %v1771, %v1770
    %v1797 = vpack.c.b16 %v1773, %v1772
    %v1798 = vpack.c.b16 %v1775, %v1774
    %v1799 = vpack.c.b16 %v1777, %v1776
    %v1800 = vpack.c.b16 %v1779, %v1778
    %v1801 = vpack.c.b16 %v1781, %v1780
    %v1802 = vpack.c.b16 %v1783, %v1782
    %v1803 = vpack.c.b16 %v1785, %v1784
    %v1804 = vpack.c.b16 %v1787, %v1786
    %v1805 = vpack.c.b16 %v1789, %v1788
    %1822 = vmatpush.bf16.msra.mxu0 %v1797
    %1823 = vmatpush.bf16.msra.mxu0 %v1796
    %1824 = vmatpush.bf16.msra.mxu0 %v1795
    %1825 = vmatpush.bf16.msra.mxu0 %v1794
    %1826 = vmatpush.bf16.msra.mxu0 %v1793
    %1827 = vmatpush.bf16.msra.mxu0 %v1792
    %1828 = vmatpush.bf16.msra.mxu0 %v1791
    %1829 = vmatpush.bf16.msra.mxu0 %v1790
    %1830 = vmatmul.bf16.gmra.mxu0 %v1724
    %v1831 = vpop.f32.mrf.mxu0
    %v1832 = vadd.f32 0.0, %v1831
    %v1833 = vpop.f32.mrf.mxu0
    %1834 = vdwg.mxu0
    %1835 = vmatpush.bf16.msra.mxu0 %v1805
    %1836 = vmatpush.bf16.msra.mxu0 %v1804
    %1837 = vmatpush.bf16.msra.mxu0 %v1803
    %1838 = vmatpush.bf16.msra.mxu0 %v1802
    %1839 = vmatpush.bf16.msra.mxu0 %v1801
    %1840 = vmatpush.bf16.msra.mxu0 %v1800
    %1841 = vmatpush.bf16.msra.mxu0 %v1799
    %1842 = vmatpush.bf16.msra.mxu0 %v1798
    %1843 = vmatmul.bf16.gmra.mxu0 %v1725
    %v1844 = vpop.f32.mrf.mxu0
    %v1845 = vadd.f32 %v1832, %v1844
    %v1846 = vpop.f32.mrf.mxu0
    %1847 = vdwg.mxu0
    %1848 = vst [vmem:[#allocation10] sm:$0xff] %v1845
    // Predicated region
    $region34: #{resdd_forward.1} parent=1 // pred_check
      _
    $region35: #{resdd_forward.1} parent=1 // pred_check_branch
      %1850 = sbr.rel (0) target = $region37
    $region36: #{resdd_forward.1} parent=1 // pred_region
      %1852 = vsyncadd [#allocation4], 0
      %s1854 = sshll.u32 [#allocation10], 4
      %s1855 = int_to_ptr.vmem [resolvable:$true] %s1854
      %s1856 = sshll.u32 %s4, 4
      %s1857 = int_to_ptr.hbm [resolvable:$true] %s1856
      %1859 = dma.vmem_to_hbm [thread:$0]  %s1855, 128, %s1857, [#allocation4]
    $region37: #{resdd_forward.1} parent=1 // pred_fallthru
      _
    // Predicated region
    $region38: #{resdd_forward.1} parent=1 // pred_check
      _
    $region39: #{resdd_forward.1} parent=1 // pred_check_branch
      %1861 = sbr.rel (0) target = $region41
    $region40: #{resdd_forward.1} parent=1 // pred_region
      %1863 = dma.done [#allocation4], 128
    $region41: #{resdd_forward.1} parent=1 // pred_fallthru
      _
    %1864 = vsyncpa [#allocation3], 1
    %1865 = vsyncpa [#allocation6], 1
    %1866 = vsyncpa [#allocation9], 1
    %1867 = vsyncpa [#allocation4], 1

</llo_original>
